<compile_context>
chip_gen: v6e
topology: v6e:2x2x1
jax: 0.10.0
libtpu: 0.0.40
codegen_flags: <defaults>
</compile_context>

<pallas_src>
import jax
import jax.numpy as jnp
import numpy as np
from jax import lax
from jax.experimental import pallas as pl
from jax.experimental.pallas import tpu as pltpu


# Spatial constants of the (repaired) 28x28 forward pass:
#   28x28 --conv1(1x1)+pool(2,2)--> 14x14 --conv2(3x3)+pool(2,2)--> 6x6
H_IN = 28
P = H_IN // 4          # 7  : side of one pool1-phase grid (7x7)
NP = P * P             # 49 : pixels per phase slab
NQ = 5 * P + 6         # 41 : flat (stride-7) positions covering the valid 6x6 grid
CO_PERM = (0, 2, 4, 6, 1, 3, 5, 7)   # conv2 output-channel slots: evens then odds


def _sigmoid(x):
    # exp and the approximate reciprocal both ride the EUP slot, keeping the
    # vector ALU free (perf review: avoid the f32 Newton-iteration divide).
    return pl.reciprocal(1.0 + jnp.exp(-x), approx=True)


def fused_forward_kernel(xp_ref, w1_ref, b1_ref, w2f_ref, b2_ref, wl_ref, bl_ref, o_ref):
    """Whole forward pass in one kernel; every intermediate lives in vregs.

    xp_ref : (3, 784)   input, 4x4-phase packed along lanes:
                        xp[ci, (4u+v)*49 + r*7 + c] = x[ci, 4r+u, 4c+v]
    w1_ref : (3, 8, 1)  conv1 weight column per input channel
    b1_ref : (8, 1)     conv1 bias
    w2f_ref: (8, 72)    conv2 weight, im2col layout, output channels slot-permuted
    b2_ref : (8, 1)     conv2 bias (slot-permuted)
    wl_ref : (41, 16)   Linear(24->4) folded through view(-1,4,24), per channel parity
    bl_ref : (4, 12)    Linear bias tiled onto the output block
    o_ref  : (4, 12)    sigmoid(Linear(view(pool2(...)))); C-order flatten == flat
                        (12, 4) Linear output
    """
    # ---- stage 1: conv1(1x1) on the full lane-packed image (3 VPU broadcast-FMAs) ----
    x = xp_ref[...]                                            # (3, 784)
    y1 = (w1_ref[0] * x[0:1, :] +
          w1_ref[1] * x[1:2, :] +
          w1_ref[2] * x[2:3, :])                               # (8, 784)

    # 2x2 max-pool over the phase lattice; bias + sigmoid applied once AFTER the
    # max (max / +bias / sigmoid commute by monotonicity).
    b1 = b1_ref[...]                                           # (8, 1)
    p1 = []        # p1[2a+b][co, r*7+c] = pool1_out[co, 2r+a, 2c+b]   (4 x (8, 49))
    for alpha in range(2):
        for beta in range(2):
            zmax = None
            for a in range(2):
                for b in range(2):
                    lo = (4 * (2 * alpha + a) + (2 * beta + b)) * NP
                    z = y1[:, lo:lo + NP]                      # static (8, 49) lane slice
                    zmax = z if zmax is None else jnp.maximum(zmax, z)
            p1.append(_sigmoid(zmax + b1))                     # (8, 49)

    # ---- stage 2: conv2(3x3) + sigmoid + 2x2 max-pool, one MXU matmul per pool phase ----
    # Hoisted: the 16 distinct (pool1-phase, offset) windows needed by any tap.
    #   S[u][v][ci, q] = pool1_sig[ci, 2*(q//7) + u, 2*(q%7) + v],  q = ii*7 + jj
    S = [[p1[(u % 2) * 2 + (v % 2)][:, (u // 2) * P + (v // 2):(u // 2) * P + (v // 2) + NQ]
          for v in range(4)] for u in range(4)]                # 16 x (8, 41)
    w2f = w2f_ref[...]                                         # (8, 72)
    zmax2 = None
    for a in range(2):                                         # pool2 phase (a, b)
        for b in range(2):
            # im2col slab: row (t=3dh+dw, ci) holds pool1_sig[ci, 2ii+a+dh, 2jj+b+dw]
            slab = jnp.concatenate(
                [S[a + dh][b + dw] for dh in range(3) for dw in range(3)],
                axis=0)                                        # (72, 41)
            z2 = jnp.dot(w2f, slab, preferred_element_type=jnp.float32)   # (8, 41)
            zmax2 = z2 if zmax2 is None else jnp.maximum(zmax2, z2)
    # Columns with q % 7 == 6 are junk and are zero-weighted in wl_ref (stage 3).
    out2 = _sigmoid(zmax2 + b2_ref[...])                       # (8, 41)

    # ---- stage 3: view(-1, 4, 24) + Linear(24->4) + sigmoid as one tiny MXU matmul ----
    # Slots 0..3 hold even output channels (co = 0,2,4,6), slots 4..7 the odd ones;
    # each channel's 36 values land in exactly two consecutive rows of the (12,24)
    # view, so one (41,16) weight covers both parities (even cols 0:8, odd cols 8:16).
    full8 = jnp.dot(out2, wl_ref[...], preferred_element_type=jnp.float32)   # (8, 16)
    pe = full8[0:4, 0:8]      # even channels: rows (3k, 3k+1) contributions
    po = full8[4:8, 8:16]     # odd  channels: rows (3k+1, 3k+2) contributions
    # rows (3k, 3k+1, 3k+2) of the Linear output packed along lanes of sublane k:
    blk = jnp.concatenate(
        [pe[:, 0:4], pe[:, 4:8] + po[:, 0:4], po[:, 4:8]], axis=1)           # (4, 12)
    o_ref[...] = _sigmoid(blk + bl_ref[...])


def prepare_params(params):
    """One-time host-side relayout of module parameters into kernel layouts.

    Kept outside the jitted forward so none of this runs per call.
    """
    w1, b1, w2, b2, wo, bo = [np.asarray(p, np.float32) for p in params]
    perm = np.array(CO_PERM)

    # conv1: w1k[ci, co, 0] = w1[co, ci]
    w1k = np.ascontiguousarray(w1.reshape(8, 3).T).reshape(3, 8, 1)
    b1k = b1.reshape(8, 1)

    # conv2 im2col layout: w2f[slot, (3*dh+dw)*8 + ci] = w2[CO_PERM[slot], ci, dh, dw]
    w2f = np.transpose(w2, (0, 2, 3, 1)).reshape(8, 72)[perm]
    b2k = b2[perm].reshape(8, 1)

    # Linear(24->4) folded through view(-1,4,24) of the (8,6,6) pool2 output.
    # Channel co covers 36 consecutive flat elements (1.5 rows of the (12,24)
    # matrix); parity decides the within-row phase (0 for even co, 12 for odd):
    #   wl[q, 8*par + 4*l + o] = wo[o, n], t = 12*par + 6*(q//7) + q%7,
    #   l = t // 24 (which of the channel's two view rows), n = t % 24.
    # Junk stage-2 columns (q % 7 == 6) stay zero-weighted here.
    wl = np.zeros((NQ, 16), np.float32)
    for par in range(2):
        for q in range(NQ):
            ii, jj = q // P, q % P
            if jj > 5:
                continue
            t = 12 * par + ii * 6 + jj
            l, n = t // 24, t % 24
            wl[q, 8 * par + 4 * l:8 * par + 4 * l + 4] = wo[:, n]

    # bias for the (4, 12) output block: column c -> output feature c % 4
    blb = np.tile(bo[None, :], (4, 3))

    return tuple(jnp.asarray(a) for a in (w1k, b1k, w2f, b2k, wl, blb))


def model_forward(x, kparams):
    """x: (1, 3, 28, 28) float32 (NCHW, like the PyTorch module). Returns (3, 4, 4)."""
    w1k, b1k, w2f, b2k, wl, blb = kparams
    n, cin, H, W = x.shape
    assert (n, cin, H, W) == (1, 3, H_IN, H_IN)

    # Per-call prep: 4x4 phase packing of the image so both 2x2 max-pools and the
    # 3x3 im2col become static lane slices inside the kernel.
    #   xp[ci, (4u+v)*49 + r*7 + c] = x[ci, 4r+u, 4c+v]
    xs = x[0].reshape(cin, P, 4, P, 4)
    xp = jnp.transpose(xs, (0, 2, 4, 1, 3)).reshape(cin, 16 * NP)

    vmem = pl.BlockSpec(memory_space=pltpu.MemorySpace.VMEM)
    out_blk = pl.pallas_call(
        fused_forward_kernel,
        out_shape=jax.ShapeDtypeStruct((4, 12), jnp.float32),
        in_specs=[vmem] * 7,
        out_specs=vmem,
    )(xp, w1k, b1k, w2f, b2k, wl, blb)

    # (4, 12) C-order flatten == flat (12, 4) Linear output == (3, 4, 4) view layout.
    return out_blk.reshape(3, 4, 4)


def reference_forward(x, params):
    """Pure-JAX reference of the (repaired) PyTorch forward, for validation."""
    w1, b1, w2, b2, wo, bo = params
    dn = ('NCHW', 'OIHW', 'NCHW')
    hi = lax.Precision.HIGHEST
    y = lax.conv_general_dilated(x, w1, (1, 1), 'VALID', dimension_numbers=dn,
                                 precision=hi)
    y = jax.nn.sigmoid(y + b1.reshape(1, -1, 1, 1))
    y = lax.reduce_window(y, -jnp.inf, lax.max, (1, 1, 2, 2), (1, 1, 2, 2), 'VALID')
    y = lax.conv_general_dilated(y, w2, (1, 1), 'VALID', dimension_numbers=dn,
                                 precision=hi)
    y = jax.nn.sigmoid(y + b2.reshape(1, -1, 1, 1))
    y = lax.reduce_window(y, -jnp.inf, lax.max, (1, 1, 2, 2), (1, 1, 2, 2), 'VALID')
    v3 = y.reshape(-1, 4, 24)
    return jax.nn.sigmoid(jnp.einsum('bij,kj->bik', v3, wo, precision=hi) + bo)


if __name__ == "__main__":
    key = jax.random.PRNGKey(0)
    ks = jax.random.split(key, 7)
    x = jax.random.normal(ks[0], (1, 3, H_IN, H_IN), jnp.float32)

    # deterministic synthetic parameters (shapes from the module's __init__,
    # except Linear in_features=24, see TODO above)
    w1 = jax.random.normal(ks[1], (8, 3, 1, 1), jnp.float32) * 0.5
    b1 = jax.random.normal(ks[2], (8,), jnp.float32) * 0.1
    w2 = jax.random.normal(ks[3], (8, 8, 3, 3), jnp.float32) * 0.2
    b2 = jax.random.normal(ks[4], (8,), jnp.float32) * 0.1
    wo = jax.random.normal(ks[5], (4, 24), jnp.float32) * 0.2
    bo = jax.random.normal(ks[6], (4,), jnp.float32) * 0.1
    params = (w1, b1, w2, b2, wo, bo)

    kparams = prepare_params(params)          # one-time host relayout (outside jit)
    fwd = jax.jit(model_forward)
    out = jax.block_until_ready(fwd(x, kparams))

    ref = reference_forward(x, params)
    assert out.shape == (3, 4, 4), out.shape
    # Tolerance covers the EUP approximate reciprocal in sigmoid and MXU f32
    # pass decomposition; layout/indexing bugs would produce O(0.1) errors.
    np.testing.assert_allclose(np.asarray(out), np.asarray(ref), rtol=5e-3, atol=5e-3)
    print("KERNEL_OK")
</pallas_src>

<mosaic_0001>
module attributes {stable_mosaic.version = 11 : i64} {
  func.func @fused_forward_kernel(%arg0: memref<3x784xf32, #tpu.memory_space<vmem>>, %arg1: memref<3x8x1xf32, #tpu.memory_space<vmem>>, %arg2: memref<8x1xf32, #tpu.memory_space<vmem>>, %arg3: memref<8x72xf32, #tpu.memory_space<vmem>>, %arg4: memref<8x1xf32, #tpu.memory_space<vmem>>, %arg5: memref<41x16xf32, #tpu.memory_space<vmem>>, %arg6: memref<4x12xf32, #tpu.memory_space<vmem>>, %arg7: memref<4x12xf32, #tpu.memory_space<vmem>>) attributes {dimension_semantics = [], scalar_prefetch = 0 : i64, scratch_operands = 0 : i64, tpu.core_type = #tpu.core_type<tc>} {
    %c0 = arith.constant 0 : index
    %c0_0 = arith.constant 0 : index
    %0 = vector.load %arg0[%c0, %c0_0] : memref<3x784xf32, #tpu.memory_space<vmem>>, vector<3x784xf32>
    %c0_1 = arith.constant 0 : index
    %c0_2 = arith.constant 0 : index
    %c0_3 = arith.constant 0 : index
    %1 = vector.load %arg1[%c0_1, %c0_2, %c0_3] : memref<3x8x1xf32, #tpu.memory_space<vmem>>, vector<1x8x1xf32>
    %2 = vector.shape_cast %1 : vector<1x8x1xf32> to vector<8x1xf32>
    %3 = vector.extract_strided_slice %0 {offsets = [0, 0], sizes = [1, 784], strides = [1, 1]} : vector<3x784xf32> to vector<1x784xf32>
    %4 = vector.broadcast %2 : vector<8x1xf32> to vector<8x784xf32>
    %5 = vector.broadcast %3 : vector<1x784xf32> to vector<8x784xf32>
    %6 = arith.mulf %4, %5 : vector<8x784xf32>
    %c1 = arith.constant 1 : index
    %c0_4 = arith.constant 0 : index
    %c0_5 = arith.constant 0 : index
    %7 = vector.load %arg1[%c1, %c0_4, %c0_5] : memref<3x8x1xf32, #tpu.memory_space<vmem>>, vector<1x8x1xf32>
    %8 = vector.shape_cast %7 : vector<1x8x1xf32> to vector<8x1xf32>
    %9 = vector.extract_strided_slice %0 {offsets = [1, 0], sizes = [1, 784], strides = [1, 1]} : vector<3x784xf32> to vector<1x784xf32>
    %10 = vector.broadcast %8 : vector<8x1xf32> to vector<8x784xf32>
    %11 = vector.broadcast %9 : vector<1x784xf32> to vector<8x784xf32>
    %12 = arith.mulf %10, %11 : vector<8x784xf32>
    %13 = arith.addf %6, %12 : vector<8x784xf32>
    %c2 = arith.constant 2 : index
    %c0_6 = arith.constant 0 : index
    %c0_7 = arith.constant 0 : index
    %14 = vector.load %arg1[%c2, %c0_6, %c0_7] : memref<3x8x1xf32, #tpu.memory_space<vmem>>, vector<1x8x1xf32>
    %15 = vector.shape_cast %14 : vector<1x8x1xf32> to vector<8x1xf32>
    %16 = vector.extract_strided_slice %0 {offsets = [2, 0], sizes = [1, 784], strides = [1, 1]} : vector<3x784xf32> to vector<1x784xf32>
    %17 = vector.broadcast %15 : vector<8x1xf32> to vector<8x784xf32>
    %18 = vector.broadcast %16 : vector<1x784xf32> to vector<8x784xf32>
    %19 = arith.mulf %17, %18 : vector<8x784xf32>
    %20 = arith.addf %13, %19 : vector<8x784xf32>
    %c0_8 = arith.constant 0 : index
    %c0_9 = arith.constant 0 : index
    %21 = vector.load %arg2[%c0_8, %c0_9] : memref<8x1xf32, #tpu.memory_space<vmem>>, vector<8x1xf32>
    %22 = vector.extract_strided_slice %20 {offsets = [0, 0], sizes = [8, 49], strides = [1, 1]} : vector<8x784xf32> to vector<8x49xf32>
    %23 = vector.extract_strided_slice %20 {offsets = [0, 49], sizes = [8, 49], strides = [1, 1]} : vector<8x784xf32> to vector<8x49xf32>
    %24 = arith.maximumf %22, %23 : vector<8x49xf32>
    %25 = vector.extract_strided_slice %20 {offsets = [0, 196], sizes = [8, 49], strides = [1, 1]} : vector<8x784xf32> to vector<8x49xf32>
    %26 = arith.maximumf %24, %25 : vector<8x49xf32>
    %27 = vector.extract_strided_slice %20 {offsets = [0, 245], sizes = [8, 49], strides = [1, 1]} : vector<8x784xf32> to vector<8x49xf32>
    %28 = arith.maximumf %26, %27 : vector<8x49xf32>
    %29 = vector.broadcast %21 : vector<8x1xf32> to vector<8x49xf32>
    %30 = arith.addf %28, %29 : vector<8x49xf32>
    %cst = arith.constant 0.000000e+00 : f32
    %31 = vector.broadcast %cst : f32 to vector<8x49xf32>
    %32 = arith.subf %31, %30 : vector<8x49xf32>
    %33 = math.exp %32 : vector<8x49xf32>
    %cst_10 = arith.constant 1.000000e+00 : f32
    %34 = vector.broadcast %cst_10 : f32 to vector<8x49xf32>
    %35 = arith.addf %34, %33 : vector<8x49xf32>
    %36 = tpu.reciprocal %35 {approx = true} : vector<8x49xf32> -> vector<8x49xf32>
    %37 = vector.extract_strided_slice %20 {offsets = [0, 98], sizes = [8, 49], strides = [1, 1]} : vector<8x784xf32> to vector<8x49xf32>
    %38 = vector.extract_strided_slice %20 {offsets = [0, 147], sizes = [8, 49], strides = [1, 1]} : vector<8x784xf32> to vector<8x49xf32>
    %39 = arith.maximumf %37, %38 : vector<8x49xf32>
    %40 = vector.extract_strided_slice %20 {offsets = [0, 294], sizes = [8, 49], strides = [1, 1]} : vector<8x784xf32> to vector<8x49xf32>
    %41 = arith.maximumf %39, %40 : vector<8x49xf32>
    %42 = vector.extract_strided_slice %20 {offsets = [0, 343], sizes = [8, 49], strides = [1, 1]} : vector<8x784xf32> to vector<8x49xf32>
    %43 = arith.maximumf %41, %42 : vector<8x49xf32>
    %44 = vector.broadcast %21 : vector<8x1xf32> to vector<8x49xf32>
    %45 = arith.addf %43, %44 : vector<8x49xf32>
    %cst_11 = arith.constant 0.000000e+00 : f32
    %46 = vector.broadcast %cst_11 : f32 to vector<8x49xf32>
    %47 = arith.subf %46, %45 : vector<8x49xf32>
    %48 = math.exp %47 : vector<8x49xf32>
    %cst_12 = arith.constant 1.000000e+00 : f32
    %49 = vector.broadcast %cst_12 : f32 to vector<8x49xf32>
    %50 = arith.addf %49, %48 : vector<8x49xf32>
    %51 = tpu.reciprocal %50 {approx = true} : vector<8x49xf32> -> vector<8x49xf32>
    %52 = vector.extract_strided_slice %20 {offsets = [0, 392], sizes = [8, 49], strides = [1, 1]} : vector<8x784xf32> to vector<8x49xf32>
    %53 = vector.extract_strided_slice %20 {offsets = [0, 441], sizes = [8, 49], strides = [1, 1]} : vector<8x784xf32> to vector<8x49xf32>
    %54 = arith.maximumf %52, %53 : vector<8x49xf32>
    %55 = vector.extract_strided_slice %20 {offsets = [0, 588], sizes = [8, 49], strides = [1, 1]} : vector<8x784xf32> to vector<8x49xf32>
    %56 = arith.maximumf %54, %55 : vector<8x49xf32>
    %57 = vector.extract_strided_slice %20 {offsets = [0, 637], sizes = [8, 49], strides = [1, 1]} : vector<8x784xf32> to vector<8x49xf32>
    %58 = arith.maximumf %56, %57 : vector<8x49xf32>
    %59 = vector.broadcast %21 : vector<8x1xf32> to vector<8x49xf32>
    %60 = arith.addf %58, %59 : vector<8x49xf32>
    %cst_13 = arith.constant 0.000000e+00 : f32
    %61 = vector.broadcast %cst_13 : f32 to vector<8x49xf32>
    %62 = arith.subf %61, %60 : vector<8x49xf32>
    %63 = math.exp %62 : vector<8x49xf32>
    %cst_14 = arith.constant 1.000000e+00 : f32
    %64 = vector.broadcast %cst_14 : f32 to vector<8x49xf32>
    %65 = arith.addf %64, %63 : vector<8x49xf32>
    %66 = tpu.reciprocal %65 {approx = true} : vector<8x49xf32> -> vector<8x49xf32>
    %67 = vector.extract_strided_slice %20 {offsets = [0, 490], sizes = [8, 49], strides = [1, 1]} : vector<8x784xf32> to vector<8x49xf32>
    %68 = vector.extract_strided_slice %20 {offsets = [0, 539], sizes = [8, 49], strides = [1, 1]} : vector<8x784xf32> to vector<8x49xf32>
    %69 = arith.maximumf %67, %68 : vector<8x49xf32>
    %70 = vector.extract_strided_slice %20 {offsets = [0, 686], sizes = [8, 49], strides = [1, 1]} : vector<8x784xf32> to vector<8x49xf32>
    %71 = arith.maximumf %69, %70 : vector<8x49xf32>
    %72 = vector.extract_strided_slice %20 {offsets = [0, 735], sizes = [8, 49], strides = [1, 1]} : vector<8x784xf32> to vector<8x49xf32>
    %73 = arith.maximumf %71, %72 : vector<8x49xf32>
    %74 = vector.broadcast %21 : vector<8x1xf32> to vector<8x49xf32>
    %75 = arith.addf %73, %74 : vector<8x49xf32>
    %cst_15 = arith.constant 0.000000e+00 : f32
    %76 = vector.broadcast %cst_15 : f32 to vector<8x49xf32>
    %77 = arith.subf %76, %75 : vector<8x49xf32>
    %78 = math.exp %77 : vector<8x49xf32>
    %cst_16 = arith.constant 1.000000e+00 : f32
    %79 = vector.broadcast %cst_16 : f32 to vector<8x49xf32>
    %80 = arith.addf %79, %78 : vector<8x49xf32>
    %81 = tpu.reciprocal %80 {approx = true} : vector<8x49xf32> -> vector<8x49xf32>
    %82 = vector.extract_strided_slice %36 {offsets = [0, 0], sizes = [8, 41], strides = [1, 1]} : vector<8x49xf32> to vector<8x41xf32>
    %83 = vector.extract_strided_slice %51 {offsets = [0, 0], sizes = [8, 41], strides = [1, 1]} : vector<8x49xf32> to vector<8x41xf32>
    %84 = vector.extract_strided_slice %36 {offsets = [0, 1], sizes = [8, 41], strides = [1, 1]} : vector<8x49xf32> to vector<8x41xf32>
    %85 = vector.extract_strided_slice %51 {offsets = [0, 1], sizes = [8, 41], strides = [1, 1]} : vector<8x49xf32> to vector<8x41xf32>
    %86 = vector.extract_strided_slice %66 {offsets = [0, 0], sizes = [8, 41], strides = [1, 1]} : vector<8x49xf32> to vector<8x41xf32>
    %87 = vector.extract_strided_slice %81 {offsets = [0, 0], sizes = [8, 41], strides = [1, 1]} : vector<8x49xf32> to vector<8x41xf32>
    %88 = vector.extract_strided_slice %66 {offsets = [0, 1], sizes = [8, 41], strides = [1, 1]} : vector<8x49xf32> to vector<8x41xf32>
    %89 = vector.extract_strided_slice %81 {offsets = [0, 1], sizes = [8, 41], strides = [1, 1]} : vector<8x49xf32> to vector<8x41xf32>
    %90 = vector.extract_strided_slice %36 {offsets = [0, 7], sizes = [8, 41], strides = [1, 1]} : vector<8x49xf32> to vector<8x41xf32>
    %91 = vector.extract_strided_slice %51 {offsets = [0, 7], sizes = [8, 41], strides = [1, 1]} : vector<8x49xf32> to vector<8x41xf32>
    %92 = vector.extract_strided_slice %36 {offsets = [0, 8], sizes = [8, 41], strides = [1, 1]} : vector<8x49xf32> to vector<8x41xf32>
    %93 = vector.extract_strided_slice %51 {offsets = [0, 8], sizes = [8, 41], strides = [1, 1]} : vector<8x49xf32> to vector<8x41xf32>
    %94 = vector.extract_strided_slice %66 {offsets = [0, 7], sizes = [8, 41], strides = [1, 1]} : vector<8x49xf32> to vector<8x41xf32>
    %95 = vector.extract_strided_slice %81 {offsets = [0, 7], sizes = [8, 41], strides = [1, 1]} : vector<8x49xf32> to vector<8x41xf32>
    %96 = vector.extract_strided_slice %66 {offsets = [0, 8], sizes = [8, 41], strides = [1, 1]} : vector<8x49xf32> to vector<8x41xf32>
    %97 = vector.extract_strided_slice %81 {offsets = [0, 8], sizes = [8, 41], strides = [1, 1]} : vector<8x49xf32> to vector<8x41xf32>
    %c0_17 = arith.constant 0 : index
    %c0_18 = arith.constant 0 : index
    %98 = vector.load %arg3[%c0_17, %c0_18] : memref<8x72xf32, #tpu.memory_space<vmem>>, vector<8x72xf32>
    %99 = tpu.concatenate %82, %83, %84, %86, %87, %88, %90, %91, %92 in 0 : vector<8x41xf32>, vector<8x41xf32>, vector<8x41xf32>, vector<8x41xf32>, vector<8x41xf32>, vector<8x41xf32>, vector<8x41xf32>, vector<8x41xf32>, vector<8x41xf32> -> vector<72x41xf32>
    %cst_19 = arith.constant dense<0.000000e+00> : vector<8x41xf32>
    %100 = tpu.matmul %98, %99, %cst_19 {dimension_numbers = #tpu.dot_dimension_numbers<[1], [0], [0], [1], [0, 0, 1, 1], [], []>} : vector<8x72xf32>, vector<72x41xf32>, vector<8x41xf32> -> vector<8x41xf32>
    %101 = tpu.concatenate %83, %84, %85, %87, %88, %89, %91, %92, %93 in 0 : vector<8x41xf32>, vector<8x41xf32>, vector<8x41xf32>, vector<8x41xf32>, vector<8x41xf32>, vector<8x41xf32>, vector<8x41xf32>, vector<8x41xf32>, vector<8x41xf32> -> vector<72x41xf32>
    %cst_20 = arith.constant dense<0.000000e+00> : vector<8x41xf32>
    %102 = tpu.matmul %98, %101, %cst_20 {dimension_numbers = #tpu.dot_dimension_numbers<[1], [0], [0], [1], [0, 0, 1, 1], [], []>} : vector<8x72xf32>, vector<72x41xf32>, vector<8x41xf32> -> vector<8x41xf32>
    %103 = arith.maximumf %100, %102 : vector<8x41xf32>
    %104 = tpu.concatenate %86, %87, %88, %90, %91, %92, %94, %95, %96 in 0 : vector<8x41xf32>, vector<8x41xf32>, vector<8x41xf32>, vector<8x41xf32>, vector<8x41xf32>, vector<8x41xf32>, vector<8x41xf32>, vector<8x41xf32>, vector<8x41xf32> -> vector<72x41xf32>
    %cst_21 = arith.constant dense<0.000000e+00> : vector<8x41xf32>
    %105 = tpu.matmul %98, %104, %cst_21 {dimension_numbers = #tpu.dot_dimension_numbers<[1], [0], [0], [1], [0, 0, 1, 1], [], []>} : vector<8x72xf32>, vector<72x41xf32>, vector<8x41xf32> -> vector<8x41xf32>
    %106 = arith.maximumf %103, %105 : vector<8x41xf32>
    %107 = tpu.concatenate %87, %88, %89, %91, %92, %93, %95, %96, %97 in 0 : vector<8x41xf32>, vector<8x41xf32>, vector<8x41xf32>, vector<8x41xf32>, vector<8x41xf32>, vector<8x41xf32>, vector<8x41xf32>, vector<8x41xf32>, vector<8x41xf32> -> vector<72x41xf32>
    %cst_22 = arith.constant dense<0.000000e+00> : vector<8x41xf32>
    %108 = tpu.matmul %98, %107, %cst_22 {dimension_numbers = #tpu.dot_dimension_numbers<[1], [0], [0], [1], [0, 0, 1, 1], [], []>} : vector<8x72xf32>, vector<72x41xf32>, vector<8x41xf32> -> vector<8x41xf32>
    %109 = arith.maximumf %106, %108 : vector<8x41xf32>
    %c0_23 = arith.constant 0 : index
    %c0_24 = arith.constant 0 : index
    %110 = vector.load %arg4[%c0_23, %c0_24] : memref<8x1xf32, #tpu.memory_space<vmem>>, vector<8x1xf32>
    %111 = vector.broadcast %110 : vector<8x1xf32> to vector<8x41xf32>
    %112 = arith.addf %109, %111 : vector<8x41xf32>
    %cst_25 = arith.constant 0.000000e+00 : f32
    %113 = vector.broadcast %cst_25 : f32 to vector<8x41xf32>
    %114 = arith.subf %113, %112 : vector<8x41xf32>
    %115 = math.exp %114 : vector<8x41xf32>
    %cst_26 = arith.constant 1.000000e+00 : f32
    %116 = vector.broadcast %cst_26 : f32 to vector<8x41xf32>
    %117 = arith.addf %116, %115 : vector<8x41xf32>
    %118 = tpu.reciprocal %117 {approx = true} : vector<8x41xf32> -> vector<8x41xf32>
    %c0_27 = arith.constant 0 : index
    %c0_28 = arith.constant 0 : index
    %119 = vector.load %arg5[%c0_27, %c0_28] : memref<41x16xf32, #tpu.memory_space<vmem>>, vector<41x16xf32>
    %cst_29 = arith.constant dense<0.000000e+00> : vector<8x16xf32>
    %120 = tpu.matmul %118, %119, %cst_29 {dimension_numbers = #tpu.dot_dimension_numbers<[1], [0], [0], [1], [0, 0, 1, 1], [], []>} : vector<8x41xf32>, vector<41x16xf32>, vector<8x16xf32> -> vector<8x16xf32>
    %121 = vector.extract_strided_slice %120 {offsets = [0, 0], sizes = [4, 8], strides = [1, 1]} : vector<8x16xf32> to vector<4x8xf32>
    %122 = vector.extract_strided_slice %120 {offsets = [4, 8], sizes = [4, 8], strides = [1, 1]} : vector<8x16xf32> to vector<4x8xf32>
    %123 = vector.extract_strided_slice %121 {offsets = [0, 0], sizes = [4, 4], strides = [1, 1]} : vector<4x8xf32> to vector<4x4xf32>
    %124 = vector.extract_strided_slice %121 {offsets = [0, 4], sizes = [4, 4], strides = [1, 1]} : vector<4x8xf32> to vector<4x4xf32>
    %125 = vector.extract_strided_slice %122 {offsets = [0, 0], sizes = [4, 4], strides = [1, 1]} : vector<4x8xf32> to vector<4x4xf32>
    %126 = arith.addf %124, %125 : vector<4x4xf32>
    %127 = vector.extract_strided_slice %122 {offsets = [0, 4], sizes = [4, 4], strides = [1, 1]} : vector<4x8xf32> to vector<4x4xf32>
    %128 = tpu.concatenate %123, %126, %127 in 1 : vector<4x4xf32>, vector<4x4xf32>, vector<4x4xf32> -> vector<4x12xf32>
    %c0_30 = arith.constant 0 : index
    %c0_31 = arith.constant 0 : index
    %129 = vector.load %arg6[%c0_30, %c0_31] : memref<4x12xf32, #tpu.memory_space<vmem>>, vector<4x12xf32>
    %130 = arith.addf %128, %129 : vector<4x12xf32>
    %cst_32 = arith.constant 0.000000e+00 : f32
    %131 = vector.broadcast %cst_32 : f32 to vector<4x12xf32>
    %132 = arith.subf %131, %130 : vector<4x12xf32>
    %133 = math.exp %132 : vector<4x12xf32>
    %cst_33 = arith.constant 1.000000e+00 : f32
    %134 = vector.broadcast %cst_33 : f32 to vector<4x12xf32>
    %135 = arith.addf %134, %133 : vector<4x12xf32>
    %136 = tpu.reciprocal %135 {approx = true} : vector<4x12xf32> -> vector<4x12xf32>
    %c0_34 = arith.constant 0 : index
    %c0_35 = arith.constant 0 : index
    %137 = vector.load %arg7[%c0_34, %c0_35] : memref<4x12xf32, #tpu.memory_space<vmem>>, vector<4x12xf32>
    tpu.vector_store %arg7[%c0_34, %c0_35], %136 {strides = array<i32>} : memref<4x12xf32, #tpu.memory_space<vmem>>, vector<4x12xf32>,
    return
  }
}

</mosaic_0001>

<llo_original>
// kernel: squeeze.1
$region0: #{squeeze.1}
  %s0 = inlined_call_operand.vmem [shape: f32[3,28,28], index: 0, kind: input, shape index: {}]
  %s1 = inlined_call_operand.vmem [shape: f32[3,7,4,7,4], index: 1, kind: output, shape index: {}]
  %v2 = vld [vmem:[%s0] sm:$0xff]
  %vm3 = vcmask 31744
  %4 = vst.msk [vmem:[%s1] ss:$8 sm:$0xf] %vm3, %v2
  %5 = vst.msk [vmem:[%s1] ss:$8 sm:$0xf0] %vm3, %v2
  %s6 = scalar_lea.vmem %s0, 8
  %v7 = vld [vmem:[%s6] sm:$0xff]
  %vm8 = vcmask 31744
  %s9 = scalar_lea.vmem %s1, 64
  %10 = vst.msk [vmem:[%s9] ss:$8 sm:$0xf] %vm8, %v7
  %s11 = scalar_lea.vmem %s1, 64
  %12 = vst.msk [vmem:[%s11] ss:$8 sm:$0xf0] %vm8, %v7
  %s13 = scalar_lea.vmem %s0, 16
  %v14 = vld [vmem:[%s13] sm:$0xff]
  %vm15 = vcmask 31744
  %s16 = scalar_lea.vmem %s1, 128
  %17 = vst.msk [vmem:[%s16] ss:$8 sm:$0xf] %vm15, %v14
  %s18 = scalar_lea.vmem %s1, 128
  %19 = vst.msk [vmem:[%s18] ss:$8 sm:$0xf0] %vm15, %v14
  %s20 = scalar_lea.vmem %s0, 24
  %v21 = vld [vmem:[%s20] sm:$0xf]
  %vm22 = vcmask 31744
  %s23 = scalar_lea.vmem %s1, 192
  %24 = vst.msk [vmem:[%s23] ss:$8 sm:$0xf] %vm22, %v21
  %s25 = scalar_lea.vmem %s0, 32
  %v26 = vld [vmem:[%s25] sm:$0xff]
  %vm27 = vcmask 31744
  %s28 = scalar_lea.vmem %s1, 224
  %29 = vst.msk [vmem:[%s28] ss:$8 sm:$0xf] %vm27, %v26
  %s30 = scalar_lea.vmem %s1, 224
  %31 = vst.msk [vmem:[%s30] ss:$8 sm:$0xf0] %vm27, %v26
  %s32 = scalar_lea.vmem %s0, 40
  %v33 = vld [vmem:[%s32] sm:$0xff]
  %vm34 = vcmask 31744
  %s35 = scalar_lea.vmem %s1, 288
  %36 = vst.msk [vmem:[%s35] ss:$8 sm:$0xf] %vm34, %v33
  %s37 = scalar_lea.vmem %s1, 288
  %38 = vst.msk [vmem:[%s37] ss:$8 sm:$0xf0] %vm34, %v33
  %s39 = scalar_lea.vmem %s0, 48
  %v40 = vld [vmem:[%s39] sm:$0xff]
  %vm41 = vcmask 31744
  %s42 = scalar_lea.vmem %s1, 352
  %43 = vst.msk [vmem:[%s42] ss:$8 sm:$0xf] %vm41, %v40
  %s44 = scalar_lea.vmem %s1, 352
  %45 = vst.msk [vmem:[%s44] ss:$8 sm:$0xf0] %vm41, %v40
  %s46 = scalar_lea.vmem %s0, 56
  %v47 = vld [vmem:[%s46] sm:$0xf]
  %vm48 = vcmask 31744
  %s49 = scalar_lea.vmem %s1, 416
  %50 = vst.msk [vmem:[%s49] ss:$8 sm:$0xf] %vm48, %v47
  %s51 = scalar_lea.vmem %s0, 64
  %v52 = vld [vmem:[%s51] sm:$0xff]
  %vm53 = vcmask 31744
  %s54 = scalar_lea.vmem %s1, 448
  %55 = vst.msk [vmem:[%s54] ss:$8 sm:$0xf] %vm53, %v52
  %s56 = scalar_lea.vmem %s1, 448
  %57 = vst.msk [vmem:[%s56] ss:$8 sm:$0xf0] %vm53, %v52
  %s58 = scalar_lea.vmem %s0, 72
  %v59 = vld [vmem:[%s58] sm:$0xff]
  %vm60 = vcmask 31744
  %s61 = scalar_lea.vmem %s1, 512
  %62 = vst.msk [vmem:[%s61] ss:$8 sm:$0xf] %vm60, %v59
  %s63 = scalar_lea.vmem %s1, 512
  %64 = vst.msk [vmem:[%s63] ss:$8 sm:$0xf0] %vm60, %v59
  %s65 = scalar_lea.vmem %s0, 80
  %v66 = vld [vmem:[%s65] sm:$0xff]
  %vm67 = vcmask 31744
  %s68 = scalar_lea.vmem %s1, 576
  %69 = vst.msk [vmem:[%s68] ss:$8 sm:$0xf] %vm67, %v66
  %s70 = scalar_lea.vmem %s1, 576
  %71 = vst.msk [vmem:[%s70] ss:$8 sm:$0xf0] %vm67, %v66
  %s72 = scalar_lea.vmem %s0, 88
  %v73 = vld [vmem:[%s72] sm:$0xf]
  %vm74 = vcmask 31744
  %s75 = scalar_lea.vmem %s1, 640
  %76 = vst.msk [vmem:[%s75] ss:$8 sm:$0xf] %vm74, %v73
  %v77 = vld [vmem:[%s0] sm:$0xff]
  %78 = vrot.lane.b32.xlu0 %v77, 124
  %v79 = vpop.permute.xlu0 %78
  %vm80 = vcmask 31744
  %s81 = scalar_lea.vmem %s1, 1
  %82 = vst.msk [vmem:[%s81] ss:$8 sm:$0xf] %vm80, %v79
  %s83 = scalar_lea.vmem %s1, 1
  %84 = vst.msk [vmem:[%s83] ss:$8 sm:$0xf0] %vm80, %v79
  %s85 = scalar_lea.vmem %s0, 8
  %v86 = vld [vmem:[%s85] sm:$0xff]
  %87 = vrot.lane.b32.xlu0 %v86, 124
  %v88 = vpop.permute.xlu0 %87
  %vm89 = vcmask 31744
  %s90 = scalar_lea.vmem %s1, 65
  %91 = vst.msk [vmem:[%s90] ss:$8 sm:$0xf] %vm89, %v88
  %s92 = scalar_lea.vmem %s1, 65
  %93 = vst.msk [vmem:[%s92] ss:$8 sm:$0xf0] %vm89, %v88
  %s94 = scalar_lea.vmem %s0, 16
  %v95 = vld [vmem:[%s94] sm:$0xff]
  %96 = vrot.lane.b32.xlu0 %v95, 124
  %v97 = vpop.permute.xlu0 %96
  %vm98 = vcmask 31744
  %s99 = scalar_lea.vmem %s1, 129
  %100 = vst.msk [vmem:[%s99] ss:$8 sm:$0xf] %vm98, %v97
  %s101 = scalar_lea.vmem %s1, 129
  %102 = vst.msk [vmem:[%s101] ss:$8 sm:$0xf0] %vm98, %v97
  %s103 = scalar_lea.vmem %s0, 24
  %v104 = vld.sshfl [vmem:[%s103] sm:$0xff pattern:$0xba983210]
  %105 = vrot.lane.b32.xlu0 %v104, 124
  %v106 = vpop.permute.xlu0 %105
  %vm107 = vcmask 31744
  %s108 = scalar_lea.vmem %s1, 193
  %109 = vst.msk [vmem:[%s108] ss:$8 sm:$0xf] %vm107, %v106
  %s110 = scalar_lea.vmem %s1, 193
  %111 = vst.msk [vmem:[%s110] ss:$8 sm:$0xf0] %vm107, %v106
  %s112 = scalar_lea.vmem %s0, 36
  %v113 = vld [vmem:[%s112] sm:$0xff]
  %114 = vrot.lane.b32.xlu0 %v113, 124
  %v115 = vpop.permute.xlu0 %114
  %vm116 = vcmask 31744
  %s117 = scalar_lea.vmem %s1, 257
  %118 = vst.msk [vmem:[%s117] ss:$8 sm:$0xf] %vm116, %v115
  %s119 = scalar_lea.vmem %s1, 257
  %120 = vst.msk [vmem:[%s119] ss:$8 sm:$0xf0] %vm116, %v115
  %s121 = scalar_lea.vmem %s0, 44
  %v122 = vld [vmem:[%s121] sm:$0xff]
  %123 = vrot.lane.b32.xlu0 %v122, 124
  %v124 = vpop.permute.xlu0 %123
  %vm125 = vcmask 31744
  %s126 = scalar_lea.vmem %s1, 321
  %127 = vst.msk [vmem:[%s126] ss:$8 sm:$0xf] %vm125, %v124
  %s128 = scalar_lea.vmem %s1, 321
  %129 = vst.msk [vmem:[%s128] ss:$8 sm:$0xf0] %vm125, %v124
  %s130 = scalar_lea.vmem %s0, 52
  %v131 = vld [vmem:[%s130] sm:$0xff]
  %132 = vrot.lane.b32.xlu0 %v131, 124
  %v133 = vpop.permute.xlu0 %132
  %vm134 = vcmask 31744
  %s135 = scalar_lea.vmem %s1, 385
  %136 = vst.msk [vmem:[%s135] ss:$8 sm:$0xf] %vm134, %v133
  %s137 = scalar_lea.vmem %s1, 385
  %138 = vst.msk [vmem:[%s137] ss:$8 sm:$0xf0] %vm134, %v133
  %s139 = scalar_lea.vmem %s0, 64
  %v140 = vld [vmem:[%s139] sm:$0xff]
  %141 = vrot.lane.b32.xlu0 %v140, 124
  %v142 = vpop.permute.xlu0 %141
  %vm143 = vcmask 31744
  %s144 = scalar_lea.vmem %s1, 449
  %145 = vst.msk [vmem:[%s144] ss:$8 sm:$0xf] %vm143, %v142
  %s146 = scalar_lea.vmem %s1, 449
  %147 = vst.msk [vmem:[%s146] ss:$8 sm:$0xf0] %vm143, %v142
  %s148 = scalar_lea.vmem %s0, 72
  %v149 = vld [vmem:[%s148] sm:$0xff]
  %150 = vrot.lane.b32.xlu0 %v149, 124
  %v151 = vpop.permute.xlu0 %150
  %vm152 = vcmask 31744
  %s153 = scalar_lea.vmem %s1, 513
  %154 = vst.msk [vmem:[%s153] ss:$8 sm:$0xf] %vm152, %v151
  %s155 = scalar_lea.vmem %s1, 513
  %156 = vst.msk [vmem:[%s155] ss:$8 sm:$0xf0] %vm152, %v151
  %s157 = scalar_lea.vmem %s0, 80
  %v158 = vld [vmem:[%s157] sm:$0xff]
  %159 = vrot.lane.b32.xlu0 %v158, 124
  %v160 = vpop.permute.xlu0 %159
  %vm161 = vcmask 31744
  %s162 = scalar_lea.vmem %s1, 577
  %163 = vst.msk [vmem:[%s162] ss:$8 sm:$0xf] %vm161, %v160
  %s164 = scalar_lea.vmem %s1, 577
  %165 = vst.msk [vmem:[%s164] ss:$8 sm:$0xf0] %vm161, %v160
  %s166 = scalar_lea.vmem %s0, 88
  %v167 = vld [vmem:[%s166] sm:$0xf]
  %168 = vrot.lane.b32.xlu0 %v167, 124
  %v169 = vpop.permute.xlu0 %168
  %vm170 = vcmask 31744
  %s171 = scalar_lea.vmem %s1, 641
  %172 = vst.msk [vmem:[%s171] ss:$8 sm:$0xf] %vm170, %v169
  %v173 = vld [vmem:[%s0] sm:$0xff]
  %174 = vrot.lane.b32.xlu0 %v173, 120
  %v175 = vpop.permute.xlu0 %174
  %vm176 = vcmask 31744
  %s177 = scalar_lea.vmem %s1, 2
  %178 = vst.msk [vmem:[%s177] ss:$8 sm:$0xf] %vm176, %v175
  %s179 = scalar_lea.vmem %s1, 2
  %180 = vst.msk [vmem:[%s179] ss:$8 sm:$0xf0] %vm176, %v175
  %s181 = scalar_lea.vmem %s0, 8
  %v182 = vld [vmem:[%s181] sm:$0xff]
  %183 = vrot.lane.b32.xlu0 %v182, 120
  %v184 = vpop.permute.xlu0 %183
  %vm185 = vcmask 31744
  %s186 = scalar_lea.vmem %s1, 66
  %187 = vst.msk [vmem:[%s186] ss:$8 sm:$0xf] %vm185, %v184
  %s188 = scalar_lea.vmem %s1, 66
  %189 = vst.msk [vmem:[%s188] ss:$8 sm:$0xf0] %vm185, %v184
  %s190 = scalar_lea.vmem %s0, 16
  %v191 = vld [vmem:[%s190] sm:$0xff]
  %192 = vrot.lane.b32.xlu0 %v191, 120
  %v193 = vpop.permute.xlu0 %192
  %vm194 = vcmask 31744
  %s195 = scalar_lea.vmem %s1, 130
  %196 = vst.msk [vmem:[%s195] ss:$8 sm:$0xf] %vm194, %v193
  %s197 = scalar_lea.vmem %s1, 130
  %198 = vst.msk [vmem:[%s197] ss:$8 sm:$0xf0] %vm194, %v193
  %s199 = scalar_lea.vmem %s0, 24
  %v200 = vld.sshfl [vmem:[%s199] sm:$0xff pattern:$0xba983210]
  %201 = vrot.lane.b32.xlu0 %v200, 120
  %v202 = vpop.permute.xlu0 %201
  %vm203 = vcmask 31744
  %s204 = scalar_lea.vmem %s1, 194
  %205 = vst.msk [vmem:[%s204] ss:$8 sm:$0xf] %vm203, %v202
  %s206 = scalar_lea.vmem %s1, 194
  %207 = vst.msk [vmem:[%s206] ss:$8 sm:$0xf0] %vm203, %v202
  %s208 = scalar_lea.vmem %s0, 36
  %v209 = vld [vmem:[%s208] sm:$0xff]
  %210 = vrot.lane.b32.xlu0 %v209, 120
  %v211 = vpop.permute.xlu0 %210
  %vm212 = vcmask 31744
  %s213 = scalar_lea.vmem %s1, 258
  %214 = vst.msk [vmem:[%s213] ss:$8 sm:$0xf] %vm212, %v211
  %s215 = scalar_lea.vmem %s1, 258
  %216 = vst.msk [vmem:[%s215] ss:$8 sm:$0xf0] %vm212, %v211
  %s217 = scalar_lea.vmem %s0, 44
  %v218 = vld [vmem:[%s217] sm:$0xff]
  %219 = vrot.lane.b32.xlu0 %v218, 120
  %v220 = vpop.permute.xlu0 %219
  %vm221 = vcmask 31744
  %s222 = scalar_lea.vmem %s1, 322
  %223 = vst.msk [vmem:[%s222] ss:$8 sm:$0xf] %vm221, %v220
  %s224 = scalar_lea.vmem %s1, 322
  %225 = vst.msk [vmem:[%s224] ss:$8 sm:$0xf0] %vm221, %v220
  %s226 = scalar_lea.vmem %s0, 52
  %v227 = vld [vmem:[%s226] sm:$0xff]
  %228 = vrot.lane.b32.xlu0 %v227, 120
  %v229 = vpop.permute.xlu0 %228
  %vm230 = vcmask 31744
  %s231 = scalar_lea.vmem %s1, 386
  %232 = vst.msk [vmem:[%s231] ss:$8 sm:$0xf] %vm230, %v229
  %s233 = scalar_lea.vmem %s1, 386
  %234 = vst.msk [vmem:[%s233] ss:$8 sm:$0xf0] %vm230, %v229
  %s235 = scalar_lea.vmem %s0, 64
  %v236 = vld [vmem:[%s235] sm:$0xff]
  %237 = vrot.lane.b32.xlu0 %v236, 120
  %v238 = vpop.permute.xlu0 %237
  %vm239 = vcmask 31744
  %s240 = scalar_lea.vmem %s1, 450
  %241 = vst.msk [vmem:[%s240] ss:$8 sm:$0xf] %vm239, %v238
  %s242 = scalar_lea.vmem %s1, 450
  %243 = vst.msk [vmem:[%s242] ss:$8 sm:$0xf0] %vm239, %v238
  %s244 = scalar_lea.vmem %s0, 72
  %v245 = vld [vmem:[%s244] sm:$0xff]
  %246 = vrot.lane.b32.xlu0 %v245, 120
  %v247 = vpop.permute.xlu0 %246
  %vm248 = vcmask 31744
  %s249 = scalar_lea.vmem %s1, 514
  %250 = vst.msk [vmem:[%s249] ss:$8 sm:$0xf] %vm248, %v247
  %s251 = scalar_lea.vmem %s1, 514
  %252 = vst.msk [vmem:[%s251] ss:$8 sm:$0xf0] %vm248, %v247
  %s253 = scalar_lea.vmem %s0, 80
  %v254 = vld [vmem:[%s253] sm:$0xff]
  %255 = vrot.lane.b32.xlu0 %v254, 120
  %v256 = vpop.permute.xlu0 %255
  %vm257 = vcmask 31744
  %s258 = scalar_lea.vmem %s1, 578
  %259 = vst.msk [vmem:[%s258] ss:$8 sm:$0xf] %vm257, %v256
  %s260 = scalar_lea.vmem %s1, 578
  %261 = vst.msk [vmem:[%s260] ss:$8 sm:$0xf0] %vm257, %v256
  %s262 = scalar_lea.vmem %s0, 88
  %v263 = vld [vmem:[%s262] sm:$0xf]
  %264 = vrot.lane.b32.xlu0 %v263, 120
  %v265 = vpop.permute.xlu0 %264
  %vm266 = vcmask 31744
  %s267 = scalar_lea.vmem %s1, 642
  %268 = vst.msk [vmem:[%s267] ss:$8 sm:$0xf] %vm266, %v265
  %v269 = vld [vmem:[%s0] sm:$0xff]
  %270 = vrot.lane.b32.xlu0 %v269, 116
  %v271 = vpop.permute.xlu0 %270
  %vm272 = vcmask 31744
  %s273 = scalar_lea.vmem %s1, 3
  %274 = vst.msk [vmem:[%s273] ss:$8 sm:$0xf] %vm272, %v271
  %s275 = scalar_lea.vmem %s1, 3
  %276 = vst.msk [vmem:[%s275] ss:$8 sm:$0xf0] %vm272, %v271
  %s277 = scalar_lea.vmem %s0, 8
  %v278 = vld [vmem:[%s277] sm:$0xff]
  %279 = vrot.lane.b32.xlu0 %v278, 116
  %v280 = vpop.permute.xlu0 %279
  %vm281 = vcmask 31744
  %s282 = scalar_lea.vmem %s1, 67
  %283 = vst.msk [vmem:[%s282] ss:$8 sm:$0xf] %vm281, %v280
  %s284 = scalar_lea.vmem %s1, 67
  %285 = vst.msk [vmem:[%s284] ss:$8 sm:$0xf0] %vm281, %v280
  %s286 = scalar_lea.vmem %s0, 16
  %v287 = vld [vmem:[%s286] sm:$0xff]
  %288 = vrot.lane.b32.xlu0 %v287, 116
  %v289 = vpop.permute.xlu0 %288
  %vm290 = vcmask 31744
  %s291 = scalar_lea.vmem %s1, 131
  %292 = vst.msk [vmem:[%s291] ss:$8 sm:$0xf] %vm290, %v289
  %s293 = scalar_lea.vmem %s1, 131
  %294 = vst.msk [vmem:[%s293] ss:$8 sm:$0xf0] %vm290, %v289
  %s295 = scalar_lea.vmem %s0, 24
  %v296 = vld.sshfl [vmem:[%s295] sm:$0xff pattern:$0xba983210]
  %297 = vrot.lane.b32.xlu0 %v296, 116
  %v298 = vpop.permute.xlu0 %297
  %vm299 = vcmask 31744
  %s300 = scalar_lea.vmem %s1, 195
  %301 = vst.msk [vmem:[%s300] ss:$8 sm:$0xf] %vm299, %v298
  %s302 = scalar_lea.vmem %s1, 195
  %303 = vst.msk [vmem:[%s302] ss:$8 sm:$0xf0] %vm299, %v298
  %s304 = scalar_lea.vmem %s0, 36
  %v305 = vld [vmem:[%s304] sm:$0xff]
  %306 = vrot.lane.b32.xlu0 %v305, 116
  %v307 = vpop.permute.xlu0 %306
  %vm308 = vcmask 31744
  %s309 = scalar_lea.vmem %s1, 259
  %310 = vst.msk [vmem:[%s309] ss:$8 sm:$0xf] %vm308, %v307
  %s311 = scalar_lea.vmem %s1, 259
  %312 = vst.msk [vmem:[%s311] ss:$8 sm:$0xf0] %vm308, %v307
  %s313 = scalar_lea.vmem %s0, 44
  %v314 = vld [vmem:[%s313] sm:$0xff]
  %315 = vrot.lane.b32.xlu0 %v314, 116
  %v316 = vpop.permute.xlu0 %315
  %vm317 = vcmask 31744
  %s318 = scalar_lea.vmem %s1, 323
  %319 = vst.msk [vmem:[%s318] ss:$8 sm:$0xf] %vm317, %v316
  %s320 = scalar_lea.vmem %s1, 323
  %321 = vst.msk [vmem:[%s320] ss:$8 sm:$0xf0] %vm317, %v316
  %s322 = scalar_lea.vmem %s0, 52
  %v323 = vld [vmem:[%s322] sm:$0xff]
  %324 = vrot.lane.b32.xlu0 %v323, 116
  %v325 = vpop.permute.xlu0 %324
  %vm326 = vcmask 31744
  %s327 = scalar_lea.vmem %s1, 387
  %328 = vst.msk [vmem:[%s327] ss:$8 sm:$0xf] %vm326, %v325
  %s329 = scalar_lea.vmem %s1, 387
  %330 = vst.msk [vmem:[%s329] ss:$8 sm:$0xf0] %vm326, %v325
  %s331 = scalar_lea.vmem %s0, 64
  %v332 = vld [vmem:[%s331] sm:$0xff]
  %333 = vrot.lane.b32.xlu0 %v332, 116
  %v334 = vpop.permute.xlu0 %333
  %vm335 = vcmask 31744
  %s336 = scalar_lea.vmem %s1, 451
  %337 = vst.msk [vmem:[%s336] ss:$8 sm:$0xf] %vm335, %v334
  %s338 = scalar_lea.vmem %s1, 451
  %339 = vst.msk [vmem:[%s338] ss:$8 sm:$0xf0] %vm335, %v334
  %s340 = scalar_lea.vmem %s0, 72
  %v341 = vld [vmem:[%s340] sm:$0xff]
  %342 = vrot.lane.b32.xlu0 %v341, 116
  %v343 = vpop.permute.xlu0 %342
  %vm344 = vcmask 31744
  %s345 = scalar_lea.vmem %s1, 515
  %346 = vst.msk [vmem:[%s345] ss:$8 sm:$0xf] %vm344, %v343
  %s347 = scalar_lea.vmem %s1, 515
  %348 = vst.msk [vmem:[%s347] ss:$8 sm:$0xf0] %vm344, %v343
  %s349 = scalar_lea.vmem %s0, 80
  %v350 = vld [vmem:[%s349] sm:$0xff]
  %351 = vrot.lane.b32.xlu0 %v350, 116
  %v352 = vpop.permute.xlu0 %351
  %vm353 = vcmask 31744
  %s354 = scalar_lea.vmem %s1, 579
  %355 = vst.msk [vmem:[%s354] ss:$8 sm:$0xf] %vm353, %v352
  %s356 = scalar_lea.vmem %s1, 579
  %357 = vst.msk [vmem:[%s356] ss:$8 sm:$0xf0] %vm353, %v352
  %s358 = scalar_lea.vmem %s0, 88
  %v359 = vld [vmem:[%s358] sm:$0xf]
  %360 = vrot.lane.b32.xlu0 %v359, 116
  %v361 = vpop.permute.xlu0 %360
  %vm362 = vcmask 31744
  %s363 = scalar_lea.vmem %s1, 643
  %364 = vst.msk [vmem:[%s363] ss:$8 sm:$0xf] %vm362, %v361
  %v365 = vld [vmem:[%s0] sm:$0xff]
  %366 = vrot.lane.b32.xlu0 %v365, 112
  %v367 = vpop.permute.xlu0 %366
  %vm368 = vcmask 31744
  %s369 = scalar_lea.vmem %s1, 4
  %370 = vst.msk [vmem:[%s369] ss:$8 sm:$0xf] %vm368, %v367
  %s371 = scalar_lea.vmem %s1, 4
  %372 = vst.msk [vmem:[%s371] ss:$8 sm:$0xf0] %vm368, %v367
  %s373 = scalar_lea.vmem %s0, 8
  %v374 = vld [vmem:[%s373] sm:$0xff]
  %375 = vrot.lane.b32.xlu0 %v374, 112
  %v376 = vpop.permute.xlu0 %375
  %vm377 = vcmask 31744
  %s378 = scalar_lea.vmem %s1, 68
  %379 = vst.msk [vmem:[%s378] ss:$8 sm:$0xf] %vm377, %v376
  %s380 = scalar_lea.vmem %s1, 68
  %381 = vst.msk [vmem:[%s380] ss:$8 sm:$0xf0] %vm377, %v376
  %s382 = scalar_lea.vmem %s0, 16
  %v383 = vld [vmem:[%s382] sm:$0xff]
  %384 = vrot.lane.b32.xlu0 %v383, 112
  %v385 = vpop.permute.xlu0 %384
  %vm386 = vcmask 31744
  %s387 = scalar_lea.vmem %s1, 132
  %388 = vst.msk [vmem:[%s387] ss:$8 sm:$0xf] %vm386, %v385
  %s389 = scalar_lea.vmem %s1, 132
  %390 = vst.msk [vmem:[%s389] ss:$8 sm:$0xf0] %vm386, %v385
  %s391 = scalar_lea.vmem %s0, 24
  %v392 = vld.sshfl [vmem:[%s391] sm:$0xff pattern:$0xba983210]
  %393 = vrot.lane.b32.xlu0 %v392, 112
  %v394 = vpop.permute.xlu0 %393
  %vm395 = vcmask 31744
  %s396 = scalar_lea.vmem %s1, 196
  %397 = vst.msk [vmem:[%s396] ss:$8 sm:$0xf] %vm395, %v394
  %s398 = scalar_lea.vmem %s1, 196
  %399 = vst.msk [vmem:[%s398] ss:$8 sm:$0xf0] %vm395, %v394
  %s400 = scalar_lea.vmem %s0, 36
  %v401 = vld [vmem:[%s400] sm:$0xff]
  %402 = vrot.lane.b32.xlu0 %v401, 112
  %v403 = vpop.permute.xlu0 %402
  %vm404 = vcmask 31744
  %s405 = scalar_lea.vmem %s1, 260
  %406 = vst.msk [vmem:[%s405] ss:$8 sm:$0xf] %vm404, %v403
  %s407 = scalar_lea.vmem %s1, 260
  %408 = vst.msk [vmem:[%s407] ss:$8 sm:$0xf0] %vm404, %v403
  %s409 = scalar_lea.vmem %s0, 44
  %v410 = vld [vmem:[%s409] sm:$0xff]
  %411 = vrot.lane.b32.xlu0 %v410, 112
  %v412 = vpop.permute.xlu0 %411
  %vm413 = vcmask 31744
  %s414 = scalar_lea.vmem %s1, 324
  %415 = vst.msk [vmem:[%s414] ss:$8 sm:$0xf] %vm413, %v412
  %s416 = scalar_lea.vmem %s1, 324
  %417 = vst.msk [vmem:[%s416] ss:$8 sm:$0xf0] %vm413, %v412
  %s418 = scalar_lea.vmem %s0, 52
  %v419 = vld [vmem:[%s418] sm:$0xff]
  %420 = vrot.lane.b32.xlu0 %v419, 112
  %v421 = vpop.permute.xlu0 %420
  %vm422 = vcmask 31744
  %s423 = scalar_lea.vmem %s1, 388
  %424 = vst.msk [vmem:[%s423] ss:$8 sm:$0xf] %vm422, %v421
  %s425 = scalar_lea.vmem %s1, 388
  %426 = vst.msk [vmem:[%s425] ss:$8 sm:$0xf0] %vm422, %v421
  %s427 = scalar_lea.vmem %s0, 64
  %v428 = vld [vmem:[%s427] sm:$0xff]
  %429 = vrot.lane.b32.xlu0 %v428, 112
  %v430 = vpop.permute.xlu0 %429
  %vm431 = vcmask 31744
  %s432 = scalar_lea.vmem %s1, 452
  %433 = vst.msk [vmem:[%s432] ss:$8 sm:$0xf] %vm431, %v430
  %s434 = scalar_lea.vmem %s1, 452
  %435 = vst.msk [vmem:[%s434] ss:$8 sm:$0xf0] %vm431, %v430
  %s436 = scalar_lea.vmem %s0, 72
  %v437 = vld [vmem:[%s436] sm:$0xff]
  %438 = vrot.lane.b32.xlu0 %v437, 112
  %v439 = vpop.permute.xlu0 %438
  %vm440 = vcmask 31744
  %s441 = scalar_lea.vmem %s1, 516
  %442 = vst.msk [vmem:[%s441] ss:$8 sm:$0xf] %vm440, %v439
  %s443 = scalar_lea.vmem %s1, 516
  %444 = vst.msk [vmem:[%s443] ss:$8 sm:$0xf0] %vm440, %v439
  %s445 = scalar_lea.vmem %s0, 80
  %v446 = vld [vmem:[%s445] sm:$0xff]
  %447 = vrot.lane.b32.xlu0 %v446, 112
  %v448 = vpop.permute.xlu0 %447
  %vm449 = vcmask 31744
  %s450 = scalar_lea.vmem %s1, 580
  %451 = vst.msk [vmem:[%s450] ss:$8 sm:$0xf] %vm449, %v448
  %s452 = scalar_lea.vmem %s1, 580
  %453 = vst.msk [vmem:[%s452] ss:$8 sm:$0xf0] %vm449, %v448
  %s454 = scalar_lea.vmem %s0, 88
  %v455 = vld [vmem:[%s454] sm:$0xf]
  %456 = vrot.lane.b32.xlu0 %v455, 112
  %v457 = vpop.permute.xlu0 %456
  %vm458 = vcmask 31744
  %s459 = scalar_lea.vmem %s1, 644
  %460 = vst.msk [vmem:[%s459] ss:$8 sm:$0xf] %vm458, %v457
  %v461 = vld [vmem:[%s0] sm:$0xff]
  %462 = vrot.lane.b32.xlu0 %v461, 108
  %v463 = vpop.permute.xlu0 %462
  %vm464 = vcmask 31744
  %s465 = scalar_lea.vmem %s1, 5
  %466 = vst.msk [vmem:[%s465] ss:$8 sm:$0xf] %vm464, %v463
  %s467 = scalar_lea.vmem %s1, 5
  %468 = vst.msk [vmem:[%s467] ss:$8 sm:$0xf0] %vm464, %v463
  %s469 = scalar_lea.vmem %s0, 8
  %v470 = vld [vmem:[%s469] sm:$0xff]
  %471 = vrot.lane.b32.xlu0 %v470, 108
  %v472 = vpop.permute.xlu0 %471
  %vm473 = vcmask 31744
  %s474 = scalar_lea.vmem %s1, 69
  %475 = vst.msk [vmem:[%s474] ss:$8 sm:$0xf] %vm473, %v472
  %s476 = scalar_lea.vmem %s1, 69
  %477 = vst.msk [vmem:[%s476] ss:$8 sm:$0xf0] %vm473, %v472
  %s478 = scalar_lea.vmem %s0, 16
  %v479 = vld [vmem:[%s478] sm:$0xff]
  %480 = vrot.lane.b32.xlu0 %v479, 108
  %v481 = vpop.permute.xlu0 %480
  %vm482 = vcmask 31744
  %s483 = scalar_lea.vmem %s1, 133
  %484 = vst.msk [vmem:[%s483] ss:$8 sm:$0xf] %vm482, %v481
  %s485 = scalar_lea.vmem %s1, 133
  %486 = vst.msk [vmem:[%s485] ss:$8 sm:$0xf0] %vm482, %v481
  %s487 = scalar_lea.vmem %s0, 24
  %v488 = vld.sshfl [vmem:[%s487] sm:$0xff pattern:$0xba983210]
  %489 = vrot.lane.b32.xlu0 %v488, 108
  %v490 = vpop.permute.xlu0 %489
  %vm491 = vcmask 31744
  %s492 = scalar_lea.vmem %s1, 197
  %493 = vst.msk [vmem:[%s492] ss:$8 sm:$0xf] %vm491, %v490
  %s494 = scalar_lea.vmem %s1, 197
  %495 = vst.msk [vmem:[%s494] ss:$8 sm:$0xf0] %vm491, %v490
  %s496 = scalar_lea.vmem %s0, 36
  %v497 = vld [vmem:[%s496] sm:$0xff]
  %498 = vrot.lane.b32.xlu0 %v497, 108
  %v499 = vpop.permute.xlu0 %498
  %vm500 = vcmask 31744
  %s501 = scalar_lea.vmem %s1, 261
  %502 = vst.msk [vmem:[%s501] ss:$8 sm:$0xf] %vm500, %v499
  %s503 = scalar_lea.vmem %s1, 261
  %504 = vst.msk [vmem:[%s503] ss:$8 sm:$0xf0] %vm500, %v499
  %s505 = scalar_lea.vmem %s0, 44
  %v506 = vld [vmem:[%s505] sm:$0xff]
  %507 = vrot.lane.b32.xlu0 %v506, 108
  %v508 = vpop.permute.xlu0 %507
  %vm509 = vcmask 31744
  %s510 = scalar_lea.vmem %s1, 325
  %511 = vst.msk [vmem:[%s510] ss:$8 sm:$0xf] %vm509, %v508
  %s512 = scalar_lea.vmem %s1, 325
  %513 = vst.msk [vmem:[%s512] ss:$8 sm:$0xf0] %vm509, %v508
  %s514 = scalar_lea.vmem %s0, 52
  %v515 = vld [vmem:[%s514] sm:$0xff]
  %516 = vrot.lane.b32.xlu0 %v515, 108
  %v517 = vpop.permute.xlu0 %516
  %vm518 = vcmask 31744
  %s519 = scalar_lea.vmem %s1, 389
  %520 = vst.msk [vmem:[%s519] ss:$8 sm:$0xf] %vm518, %v517
  %s521 = scalar_lea.vmem %s1, 389
  %522 = vst.msk [vmem:[%s521] ss:$8 sm:$0xf0] %vm518, %v517
  %s523 = scalar_lea.vmem %s0, 64
  %v524 = vld [vmem:[%s523] sm:$0xff]
  %525 = vrot.lane.b32.xlu0 %v524, 108
  %v526 = vpop.permute.xlu0 %525
  %vm527 = vcmask 31744
  %s528 = scalar_lea.vmem %s1, 453
  %529 = vst.msk [vmem:[%s528] ss:$8 sm:$0xf] %vm527, %v526
  %s530 = scalar_lea.vmem %s1, 453
  %531 = vst.msk [vmem:[%s530] ss:$8 sm:$0xf0] %vm527, %v526
  %s532 = scalar_lea.vmem %s0, 72
  %v533 = vld [vmem:[%s532] sm:$0xff]
  %534 = vrot.lane.b32.xlu0 %v533, 108
  %v535 = vpop.permute.xlu0 %534
  %vm536 = vcmask 31744
  %s537 = scalar_lea.vmem %s1, 517
  %538 = vst.msk [vmem:[%s537] ss:$8 sm:$0xf] %vm536, %v535
  %s539 = scalar_lea.vmem %s1, 517
  %540 = vst.msk [vmem:[%s539] ss:$8 sm:$0xf0] %vm536, %v535
  %s541 = scalar_lea.vmem %s0, 80
  %v542 = vld [vmem:[%s541] sm:$0xff]
  %543 = vrot.lane.b32.xlu0 %v542, 108
  %v544 = vpop.permute.xlu0 %543
  %vm545 = vcmask 31744
  %s546 = scalar_lea.vmem %s1, 581
  %547 = vst.msk [vmem:[%s546] ss:$8 sm:$0xf] %vm545, %v544
  %s548 = scalar_lea.vmem %s1, 581
  %549 = vst.msk [vmem:[%s548] ss:$8 sm:$0xf0] %vm545, %v544
  %s550 = scalar_lea.vmem %s0, 88
  %v551 = vld [vmem:[%s550] sm:$0xf]
  %552 = vrot.lane.b32.xlu0 %v551, 108
  %v553 = vpop.permute.xlu0 %552
  %vm554 = vcmask 31744
  %s555 = scalar_lea.vmem %s1, 645
  %556 = vst.msk [vmem:[%s555] ss:$8 sm:$0xf] %vm554, %v553
  %v557 = vld [vmem:[%s0] sm:$0xff]
  %558 = vrot.lane.b32.xlu0 %v557, 104
  %v559 = vpop.permute.xlu0 %558
  %vm560 = vcmask 31744
  %s561 = scalar_lea.vmem %s1, 6
  %562 = vst.msk [vmem:[%s561] ss:$8 sm:$0xf] %vm560, %v559
  %s563 = scalar_lea.vmem %s1, 6
  %564 = vst.msk [vmem:[%s563] ss:$8 sm:$0xf0] %vm560, %v559
  %s565 = scalar_lea.vmem %s0, 8
  %v566 = vld [vmem:[%s565] sm:$0xff]
  %567 = vrot.lane.b32.xlu0 %v566, 104
  %v568 = vpop.permute.xlu0 %567
  %vm569 = vcmask 31744
  %s570 = scalar_lea.vmem %s1, 70
  %571 = vst.msk [vmem:[%s570] ss:$8 sm:$0xf] %vm569, %v568
  %s572 = scalar_lea.vmem %s1, 70
  %573 = vst.msk [vmem:[%s572] ss:$8 sm:$0xf0] %vm569, %v568
  %s574 = scalar_lea.vmem %s0, 16
  %v575 = vld [vmem:[%s574] sm:$0xff]
  %576 = vrot.lane.b32.xlu0 %v575, 104
  %v577 = vpop.permute.xlu0 %576
  %vm578 = vcmask 31744
  %s579 = scalar_lea.vmem %s1, 134
  %580 = vst.msk [vmem:[%s579] ss:$8 sm:$0xf] %vm578, %v577
  %s581 = scalar_lea.vmem %s1, 134
  %582 = vst.msk [vmem:[%s581] ss:$8 sm:$0xf0] %vm578, %v577
  %s583 = scalar_lea.vmem %s0, 24
  %v584 = vld.sshfl [vmem:[%s583] sm:$0xff pattern:$0xba983210]
  %585 = vrot.lane.b32.xlu0 %v584, 104
  %v586 = vpop.permute.xlu0 %585
  %vm587 = vcmask 31744
  %s588 = scalar_lea.vmem %s1, 198
  %589 = vst.msk [vmem:[%s588] ss:$8 sm:$0xf] %vm587, %v586
  %s590 = scalar_lea.vmem %s1, 198
  %591 = vst.msk [vmem:[%s590] ss:$8 sm:$0xf0] %vm587, %v586
  %s592 = scalar_lea.vmem %s0, 36
  %v593 = vld [vmem:[%s592] sm:$0xff]
  %594 = vrot.lane.b32.xlu0 %v593, 104
  %v595 = vpop.permute.xlu0 %594
  %vm596 = vcmask 31744
  %s597 = scalar_lea.vmem %s1, 262
  %598 = vst.msk [vmem:[%s597] ss:$8 sm:$0xf] %vm596, %v595
  %s599 = scalar_lea.vmem %s1, 262
  %600 = vst.msk [vmem:[%s599] ss:$8 sm:$0xf0] %vm596, %v595
  %s601 = scalar_lea.vmem %s0, 44
  %v602 = vld [vmem:[%s601] sm:$0xff]
  %603 = vrot.lane.b32.xlu0 %v602, 104
  %v604 = vpop.permute.xlu0 %603
  %vm605 = vcmask 31744
  %s606 = scalar_lea.vmem %s1, 326
  %607 = vst.msk [vmem:[%s606] ss:$8 sm:$0xf] %vm605, %v604
  %s608 = scalar_lea.vmem %s1, 326
  %609 = vst.msk [vmem:[%s608] ss:$8 sm:$0xf0] %vm605, %v604
  %s610 = scalar_lea.vmem %s0, 52
  %v611 = vld [vmem:[%s610] sm:$0xff]
  %612 = vrot.lane.b32.xlu0 %v611, 104
  %v613 = vpop.permute.xlu0 %612
  %vm614 = vcmask 31744
  %s615 = scalar_lea.vmem %s1, 390
  %616 = vst.msk [vmem:[%s615] ss:$8 sm:$0xf] %vm614, %v613
  %s617 = scalar_lea.vmem %s1, 390
  %618 = vst.msk [vmem:[%s617] ss:$8 sm:$0xf0] %vm614, %v613
  %s619 = scalar_lea.vmem %s0, 64
  %v620 = vld [vmem:[%s619] sm:$0xff]
  %621 = vrot.lane.b32.xlu0 %v620, 104
  %v622 = vpop.permute.xlu0 %621
  %vm623 = vcmask 31744
  %s624 = scalar_lea.vmem %s1, 454
  %625 = vst.msk [vmem:[%s624] ss:$8 sm:$0xf] %vm623, %v622
  %s626 = scalar_lea.vmem %s1, 454
  %627 = vst.msk [vmem:[%s626] ss:$8 sm:$0xf0] %vm623, %v622
  %s628 = scalar_lea.vmem %s0, 72
  %v629 = vld [vmem:[%s628] sm:$0xff]
  %630 = vrot.lane.b32.xlu0 %v629, 104
  %v631 = vpop.permute.xlu0 %630
  %vm632 = vcmask 31744
  %s633 = scalar_lea.vmem %s1, 518
  %634 = vst.msk [vmem:[%s633] ss:$8 sm:$0xf] %vm632, %v631
  %s635 = scalar_lea.vmem %s1, 518
  %636 = vst.msk [vmem:[%s635] ss:$8 sm:$0xf0] %vm632, %v631
  %s637 = scalar_lea.vmem %s0, 80
  %v638 = vld [vmem:[%s637] sm:$0xff]
  %639 = vrot.lane.b32.xlu0 %v638, 104
  %v640 = vpop.permute.xlu0 %639
  %vm641 = vcmask 31744
  %s642 = scalar_lea.vmem %s1, 582
  %643 = vst.msk [vmem:[%s642] ss:$8 sm:$0xf] %vm641, %v640
  %s644 = scalar_lea.vmem %s1, 582
  %645 = vst.msk [vmem:[%s644] ss:$8 sm:$0xf0] %vm641, %v640
  %s646 = scalar_lea.vmem %s0, 88
  %v647 = vld [vmem:[%s646] sm:$0xf]
  %648 = vrot.lane.b32.xlu0 %v647, 104
  %v649 = vpop.permute.xlu0 %648
  %vm650 = vcmask 31744
  %s651 = scalar_lea.vmem %s1, 646
  %652 = vst.msk [vmem:[%s651] ss:$8 sm:$0xf] %vm650, %v649

// kernel: model_forward.1
$region0: #{model_forward.1}
  #allocation0 [shape = 'u32[]', space=smem, size = 0x4, offset = 0x4, fixed_abs, tag = 'smem constant byte address 0x4 - core index']
  #allocation1 [shape = 'u32[144,128]{1,0:T(1,128)}', space=vmem, size = 0x12000, scoped, tag = 'internal scratch']
  %s0 = inlined_call_operand.vmem [shape: f32[3,784], index: 0, kind: input, shape index: {}]
  %s1 = inlined_call_operand.vmem [shape: f32[3,8,1], index: 1, kind: input, shape index: {}]
  %s2 = inlined_call_operand.vmem [shape: f32[8,1], index: 2, kind: input, shape index: {}]
  %s3 = inlined_call_operand.vmem [shape: f32[8,72], index: 3, kind: input, shape index: {}]
  %s4 = inlined_call_operand.vmem [shape: f32[8,1], index: 4, kind: input, shape index: {}]
  %s5 = inlined_call_operand.vmem [shape: f32[41,16], index: 5, kind: input, shape index: {}]
  %s6 = inlined_call_operand.vmem [shape: f32[4,12], index: 6, kind: input, shape index: {}]
  %s7 = inlined_call_operand.vmem [shape: f32[4,12], index: 7, kind: output, shape index: {}]
  %s8 = sld [smem:[#allocation0]]
  $region38: #{model_forward.1} parent=0
    _
  %s10 = ssub.s32 1, %s8
  %s11 = scalar_select 0, %s10, %s8
  // Predicated region
  $region2: #{model_forward.1} parent=0 // pred_check
    _
  $region3: #{model_forward.1} parent=0 // pred_check_branch
    %13 = sbr.rel (0) target = $region5
  $region4: #{model_forward.1} parent=0 // pred_region
    _
  $region5: #{model_forward.1} parent=0 // pred_fallthru
    _
  // Predicated region
  $region6: #{model_forward.1} parent=0 // pred_check
    _
  $region7: #{model_forward.1} parent=0 // pred_check_branch
    %15 = sbr.rel (0) target = $region9
  $region8: #{model_forward.1} parent=0 // pred_region
    _
  $region9: #{model_forward.1} parent=0 // pred_fallthru
    _
  // Predicated region
  $region10: #{model_forward.1} parent=0 // pred_check
    _
  $region11: #{model_forward.1} parent=0 // pred_check_branch
    %17 = sbr.rel (0) target = $region13
  $region12: #{model_forward.1} parent=0 // pred_region
    _
  $region13: #{model_forward.1} parent=0 // pred_fallthru
    _
  // Predicated region
  $region14: #{model_forward.1} parent=0 // pred_check
    _
  $region15: #{model_forward.1} parent=0 // pred_check_branch
    %19 = sbr.rel (0) target = $region17
  $region16: #{model_forward.1} parent=0 // pred_region
    _
  $region17: #{model_forward.1} parent=0 // pred_fallthru
    _
  // Predicated region
  $region18: #{model_forward.1} parent=0 // pred_check
    _
  $region19: #{model_forward.1} parent=0 // pred_check_branch
    %21 = sbr.rel (0) target = $region21
  $region20: #{model_forward.1} parent=0 // pred_region
    _
  $region21: #{model_forward.1} parent=0 // pred_fallthru
    _
  // Predicated region
  $region22: #{model_forward.1} parent=0 // pred_check
    _
  $region23: #{model_forward.1} parent=0 // pred_check_branch
    %23 = sbr.rel (0) target = $region25
  $region24: #{model_forward.1} parent=0 // pred_region
    _
  $region25: #{model_forward.1} parent=0 // pred_fallthru
    _
  // Predicated region
  $region26: #{model_forward.1} parent=0 // pred_check
    _
  $region27: #{model_forward.1} parent=0 // pred_check_branch
    %25 = sbr.rel (0) target = $region29
  $region28: #{model_forward.1} parent=0 // pred_region
    _
  $region29: #{model_forward.1} parent=0 // pred_fallthru
    _
  %v26 = vld [vmem:[%s0] sm:$0x77]
  %v27 = vld [vmem:[%s0 + $0x8] sm:$0x77]
  %v28 = vld [vmem:[%s0 + $0x10] sm:$0x77]
  %v29 = vld [vmem:[%s0 + $0x18] sm:$0x7]
  %v30 = vld [vmem:[%s1] sm:$0xff]
  %32 = vset.pattern.permute.xlu0 0
  %33 = vperm.xlu0 %32, %v30
  %v34 = vpop.permute.xlu0 %33
  %v40 = vlaneseq
  %v41 = vshrl.u32 %v40, 7
  %v42 = vsub.s32 0, %v41
  %v43 = vrot.slane %v26, %v42
  %v44 = vlaneseq
  %v45 = vshrl.u32 %v44, 7
  %v46 = vsub.s32 4, %v45
  %v47 = vrot.slane %v26, %v46
  %v48 = vlaneseq
  %v49 = vshrl.u32 %v48, 7
  %v50 = vsub.s32 0, %v49
  %v51 = vrot.slane %v27, %v50
  %v52 = vlaneseq
  %v53 = vshrl.u32 %v52, 7
  %v54 = vsub.s32 4, %v53
  %v55 = vrot.slane %v27, %v54
  %v56 = vlaneseq
  %v57 = vshrl.u32 %v56, 7
  %v58 = vsub.s32 0, %v57
  %v59 = vrot.slane %v28, %v58
  %v60 = vlaneseq
  %v61 = vshrl.u32 %v60, 7
  %v62 = vsub.s32 4, %v61
  %v63 = vrot.slane %v28, %v62
  %v64 = vlaneseq
  %v65 = vshrl.u32 %v64, 7
  %v66 = vsub.s32 0, %v65
  %v67 = vrot.slane %v29, %v66
  %v75 = vlaneseq
  %v76 = vshrl.u32 %v75, 7
  %v77 = vsub.s32 0, %v76
  %v78 = vrot.slane %v43, %v77
  %v79 = vlaneseq
  %v80 = vshrl.u32 %v79, 7
  %v81 = vsub.s32 0, %v80
  %v82 = vrot.slane %v47, %v81
  %v83 = vlaneseq
  %v84 = vshrl.u32 %v83, 7
  %v85 = vsub.s32 0, %v84
  %v86 = vrot.slane %v51, %v85
  %v87 = vlaneseq
  %v88 = vshrl.u32 %v87, 7
  %v89 = vsub.s32 0, %v88
  %v90 = vrot.slane %v55, %v89
  %v91 = vlaneseq
  %v92 = vshrl.u32 %v91, 7
  %v93 = vsub.s32 0, %v92
  %v94 = vrot.slane %v59, %v93
  %v95 = vlaneseq
  %v96 = vshrl.u32 %v95, 7
  %v97 = vsub.s32 0, %v96
  %v98 = vrot.slane %v63, %v97
  %v99 = vlaneseq
  %v100 = vshrl.u32 %v99, 7
  %v101 = vsub.s32 0, %v100
  %v102 = vrot.slane %v67, %v101
  %v103 = vmul.f32 %v34, %v78
  %v104 = vmul.f32 %v34, %v82
  %v105 = vmul.f32 %v34, %v86
  %v106 = vmul.f32 %v34, %v90
  %v107 = vmul.f32 %v34, %v94
  %v108 = vmul.f32 %v34, %v98
  %v109 = vmul.f32 %v34, %v102
  %s110 = scalar_lea.vmem %s1, 8
  %v111 = vld [vmem:[%s110] sm:$0xff]
  %113 = vset.pattern.permute.xlu0 0
  %114 = vperm.xlu0 %113, %v111
  %v115 = vpop.permute.xlu0 %114
  %v117 = vlaneseq
  %v118 = vshrl.u32 %v117, 7
  %v119 = vsub.s32 1, %v118
  %v120 = vrot.slane %v26, %v119
  %v121 = vlaneseq
  %v122 = vshrl.u32 %v121, 7
  %v123 = vsub.s32 5, %v122
  %v124 = vrot.slane %v26, %v123
  %v125 = vlaneseq
  %v126 = vshrl.u32 %v125, 7
  %v127 = vsub.s32 1, %v126
  %v128 = vrot.slane %v27, %v127
  %v129 = vlaneseq
  %v130 = vshrl.u32 %v129, 7
  %v131 = vsub.s32 5, %v130
  %v132 = vrot.slane %v27, %v131
  %v133 = vlaneseq
  %v134 = vshrl.u32 %v133, 7
  %v135 = vsub.s32 1, %v134
  %v136 = vrot.slane %v28, %v135
  %v137 = vlaneseq
  %v138 = vshrl.u32 %v137, 7
  %v139 = vsub.s32 5, %v138
  %v140 = vrot.slane %v28, %v139
  %v141 = vlaneseq
  %v142 = vshrl.u32 %v141, 7
  %v143 = vsub.s32 1, %v142
  %v144 = vrot.slane %v29, %v143
  %v152 = vlaneseq
  %v153 = vshrl.u32 %v152, 7
  %v154 = vsub.s32 1, %v153
  %v155 = vrot.slane %v120, %v154
  %v156 = vlaneseq
  %v157 = vshrl.u32 %v156, 7
  %v158 = vsub.s32 1, %v157
  %v159 = vrot.slane %v124, %v158
  %v160 = vlaneseq
  %v161 = vshrl.u32 %v160, 7
  %v162 = vsub.s32 1, %v161
  %v163 = vrot.slane %v128, %v162
  %v164 = vlaneseq
  %v165 = vshrl.u32 %v164, 7
  %v166 = vsub.s32 1, %v165
  %v167 = vrot.slane %v132, %v166
  %v168 = vlaneseq
  %v169 = vshrl.u32 %v168, 7
  %v170 = vsub.s32 1, %v169
  %v171 = vrot.slane %v136, %v170
  %v172 = vlaneseq
  %v173 = vshrl.u32 %v172, 7
  %v174 = vsub.s32 1, %v173
  %v175 = vrot.slane %v140, %v174
  %v176 = vlaneseq
  %v177 = vshrl.u32 %v176, 7
  %v178 = vsub.s32 1, %v177
  %v179 = vrot.slane %v144, %v178
  %v180 = vmul.f32 %v115, %v155
  %v181 = vmul.f32 %v115, %v159
  %v182 = vmul.f32 %v115, %v163
  %v183 = vmul.f32 %v115, %v167
  %v184 = vmul.f32 %v115, %v171
  %v185 = vmul.f32 %v115, %v175
  %v186 = vmul.f32 %v115, %v179
  %v187 = vadd.f32 %v103, %v180
  %v188 = vadd.f32 %v104, %v181
  %v189 = vadd.f32 %v105, %v182
  %v190 = vadd.f32 %v106, %v183
  %v191 = vadd.f32 %v107, %v184
  %v192 = vadd.f32 %v108, %v185
  %v193 = vadd.f32 %v109, %v186
  %s194 = scalar_lea.vmem %s1, 16
  %v195 = vld [vmem:[%s194] sm:$0xff]
  %197 = vset.pattern.permute.xlu0 0
  %198 = vperm.xlu0 %197, %v195
  %v199 = vpop.permute.xlu0 %198
  %v201 = vlaneseq
  %v202 = vshrl.u32 %v201, 7
  %v203 = vsub.s32 2, %v202
  %v204 = vrot.slane %v26, %v203
  %v205 = vlaneseq
  %v206 = vshrl.u32 %v205, 7
  %v207 = vsub.s32 6, %v206
  %v208 = vrot.slane %v26, %v207
  %v209 = vlaneseq
  %v210 = vshrl.u32 %v209, 7
  %v211 = vsub.s32 2, %v210
  %v212 = vrot.slane %v27, %v211
  %v213 = vlaneseq
  %v214 = vshrl.u32 %v213, 7
  %v215 = vsub.s32 6, %v214
  %v216 = vrot.slane %v27, %v215
  %v217 = vlaneseq
  %v218 = vshrl.u32 %v217, 7
  %v219 = vsub.s32 2, %v218
  %v220 = vrot.slane %v28, %v219
  %v221 = vlaneseq
  %v222 = vshrl.u32 %v221, 7
  %v223 = vsub.s32 6, %v222
  %v224 = vrot.slane %v28, %v223
  %v225 = vlaneseq
  %v226 = vshrl.u32 %v225, 7
  %v227 = vsub.s32 2, %v226
  %v228 = vrot.slane %v29, %v227
  %v236 = vlaneseq
  %v237 = vshrl.u32 %v236, 7
  %v238 = vsub.s32 2, %v237
  %v239 = vrot.slane %v204, %v238
  %v240 = vlaneseq
  %v241 = vshrl.u32 %v240, 7
  %v242 = vsub.s32 2, %v241
  %v243 = vrot.slane %v208, %v242
  %v244 = vlaneseq
  %v245 = vshrl.u32 %v244, 7
  %v246 = vsub.s32 2, %v245
  %v247 = vrot.slane %v212, %v246
  %v248 = vlaneseq
  %v249 = vshrl.u32 %v248, 7
  %v250 = vsub.s32 2, %v249
  %v251 = vrot.slane %v216, %v250
  %v252 = vlaneseq
  %v253 = vshrl.u32 %v252, 7
  %v254 = vsub.s32 2, %v253
  %v255 = vrot.slane %v220, %v254
  %v256 = vlaneseq
  %v257 = vshrl.u32 %v256, 7
  %v258 = vsub.s32 2, %v257
  %v259 = vrot.slane %v224, %v258
  %v260 = vlaneseq
  %v261 = vshrl.u32 %v260, 7
  %v262 = vsub.s32 2, %v261
  %v263 = vrot.slane %v228, %v262
  %v264 = vmul.f32 %v199, %v239
  %v265 = vmul.f32 %v199, %v243
  %v266 = vmul.f32 %v199, %v247
  %v267 = vmul.f32 %v199, %v251
  %v268 = vmul.f32 %v199, %v255
  %v269 = vmul.f32 %v199, %v259
  %v270 = vmul.f32 %v199, %v263
  %v271 = vadd.f32 %v187, %v264
  %v272 = vadd.f32 %v188, %v265
  %v273 = vadd.f32 %v189, %v266
  %v274 = vadd.f32 %v190, %v267
  %v275 = vadd.f32 %v191, %v268
  %v276 = vadd.f32 %v192, %v269
  %v277 = vadd.f32 %v193, %v270
  %v278 = vld [vmem:[%s2] sm:$0xff]
  %280 = vrot.lane.b32.xlu0 %v271, 79
  %v281 = vpop.permute.xlu0 %280
  %v283 = vmax.f32 %v271, %v281
  %285 = vrot.lane.b32.xlu0 %v272, 60
  %v286 = vpop.permute.xlu0 %285
  %v288 = vmax.f32 %v283, %v286
  %290 = vrot.lane.b32.xlu0 %v272, 11
  %v291 = vpop.permute.xlu0 %290
  %292 = vrot.lane.b32.xlu0 %v273, 11
  %v293 = vpop.permute.xlu0 %292
  %vm294 = vcmask 89088
  %v295 = vsel %vm294, %v291, %v293
  %v297 = vmax.f32 %v288, %v295
  %299 = vset.pattern.permute.xlu0 0
  %300 = vperm.xlu0 %299, %v278
  %v301 = vpop.permute.xlu0 %300
  %v303 = vadd.f32 %v297, %v301
  %v304 = vsub.f32 0.0, %v303
  %v305 = vmul.f32 %v304, 1.442695
  %v306 = vpow.pop %v305
  %v307 = vadd.f32 %v306, 1.0
  %v308 = vrcp.pop %v307
  %309 = vrot.lane.b32.xlu0 %v272, 79
  %v310 = vpop.permute.xlu0 %309
  %v312 = vmax.f32 %v271, %v310
  %v313 = vmax.f32 %v272, %v310
  %314 = vrot.lane.b32.xlu0 %v273, 60
  %v315 = vpop.permute.xlu0 %314
  %v317 = vmax.f32 %v312, %v315
  %v318 = vmax.f32 %v313, %v315
  %320 = vrot.lane.b32.xlu0 %v274, 11
  %v321 = vpop.permute.xlu0 %320
  %v322 = vsel %vm294, %v293, %v321
  %v325 = vmax.f32 %v317, %v293
  %v326 = vmax.f32 %v318, %v322
  %v327 = vadd.f32 %v325, %v301
  %v328 = vadd.f32 %v326, %v301
  %v329 = vsub.f32 0.0, %v327
  %v330 = vsub.f32 0.0, %v328
  %v331 = vmul.f32 %v329, 1.442695
  %v332 = vpow.pop %v331
  %v333 = vmul.f32 %v330, 1.442695
  %v334 = vpow.pop %v333
  %v335 = vadd.f32 %v332, 1.0
  %v336 = vadd.f32 %v334, 1.0
  %v337 = vrcp.pop %v335
  %v338 = vrcp.pop %v336
  %339 = vrot.lane.b32.xlu0 %v274, 79
  %v340 = vpop.permute.xlu0 %339
  %v342 = vmax.f32 %v274, %v340
  %344 = vrot.lane.b32.xlu0 %v275, 60
  %v345 = vpop.permute.xlu0 %344
  %v347 = vmax.f32 %v342, %v345
  %349 = vrot.lane.b32.xlu0 %v275, 11
  %v350 = vpop.permute.xlu0 %349
  %351 = vrot.lane.b32.xlu0 %v276, 11
  %v352 = vpop.permute.xlu0 %351
  %v353 = vsel %vm294, %v350, %v352
  %v355 = vmax.f32 %v347, %v353
  %v356 = vadd.f32 %v355, %v301
  %v357 = vsub.f32 0.0, %v356
  %v358 = vmul.f32 %v357, 1.442695
  %v359 = vpow.pop %v358
  %v360 = vadd.f32 %v359, 1.0
  %v361 = vrcp.pop %v360
  %362 = vrot.lane.b32.xlu0 %v275, 79
  %v363 = vpop.permute.xlu0 %362
  %v365 = vmax.f32 %v274, %v363
  %v366 = vmax.f32 %v275, %v363
  %367 = vrot.lane.b32.xlu0 %v276, 60
  %v368 = vpop.permute.xlu0 %367
  %v370 = vmax.f32 %v365, %v368
  %v371 = vmax.f32 %v366, %v368
  %373 = vrot.lane.b32.xlu0 %v277, 11
  %v374 = vpop.permute.xlu0 %373
  %v375 = vsel %vm294, %v352, %v374
  %v378 = vmax.f32 %v370, %v352
  %v379 = vmax.f32 %v371, %v375
  %v380 = vadd.f32 %v378, %v301
  %v381 = vadd.f32 %v379, %v301
  %v382 = vsub.f32 0.0, %v380
  %v383 = vsub.f32 0.0, %v381
  %v384 = vmul.f32 %v382, 1.442695
  %v385 = vpow.pop %v384
  %v386 = vmul.f32 %v383, 1.442695
  %v387 = vpow.pop %v386
  %v388 = vadd.f32 %v385, 1.0
  %v389 = vadd.f32 %v387, 1.0
  %v390 = vrcp.pop %v388
  %v391 = vrcp.pop %v389
  %v392 = vld [vmem:[%s3] sm:$0xff]
  %395 = vrot.lane.b32.xlu0 %v337, 30
  %v396 = vpop.permute.xlu0 %395
  %397 = vrot.lane.b32.xlu0 %v338, 30
  %v398 = vpop.permute.xlu0 %397
  %vm399 = vcmask 244736
  %v400 = vsel %vm399, %v396, %v398
  %403 = vrot.lane.b32.xlu0 %v308, 127
  %v404 = vpop.permute.xlu0 %403
  %407 = vrot.lane.b32.xlu0 %v361, 120
  %v408 = vpop.permute.xlu0 %407
  %412 = vrot.lane.b32.xlu0 %v390, 22
  %v413 = vpop.permute.xlu0 %412
  %414 = vrot.lane.b32.xlu0 %v391, 22
  %v415 = vpop.permute.xlu0 %414
  %vm416 = vcmask 179200
  %v417 = vsel %vm416, %v413, %v415
  %419 = vrot.lane.b32.xlu0 %v361, 119
  %v420 = vpop.permute.xlu0 %419
  %422 = vrot.lane.b32.xlu0 %v308, 121
  %v423 = vpop.permute.xlu0 %422
  %425 = vrot.lane.b32.xlu0 %v337, 23
  %v426 = vpop.permute.xlu0 %425
  %427 = vrot.lane.b32.xlu0 %v338, 23
  %v428 = vpop.permute.xlu0 %427
  %vm429 = vcmask 187392
  %v430 = vsel %vm429, %v426, %v428
  %432 = vrot.lane.b32.xlu0 %v308, 120
  %v433 = vpop.permute.xlu0 %432
  %vm435 = vcmask 588800
  %v437 = vsel %vm435, %v392, 0
  %439 = vmatprep.subr.mxu0 0.0
  %440 = vmatpush1.msra.mxu0 0.0
  %441 = vmatprep.subr.mxu0 0.0
  %442 = vmatpush1.msra.mxu0 0.0
  %443 = vmatprep.subr.mxu0 0.0
  %444 = vmatpush1.msra.mxu0 0.0
  %445 = vmatprep.subr.mxu0 0.0
  %446 = vmatpush1.msra.mxu0 0.0
  %447 = vmatprep.subr.mxu0 0.0
  %448 = vmatpush1.msra.mxu0 0.0
  %449 = vmatprep.subr.mxu0 0.0
  %450 = vmatpush1.msra.mxu0 0.0
  %451 = vmatprep.subr.mxu0 0.0
  %452 = vmatpush1.msra.mxu0 0.0
  %453 = vmatprep.subr.mxu0 0.0
  %454 = vmatpush1.msra.mxu0 %v433
  %455 = vmatprep.subr.mxu0 0.0
  %456 = vmatpush1.msra.mxu0 %v430
  %457 = vmatprep.subr.mxu0 0.0
  %458 = vmatpush1.msra.mxu0 %v423
  %459 = vmatprep.subr.mxu0 0.0
  %460 = vmatpush1.msra.mxu0 %v420
  %461 = vmatprep.subr.mxu0 0.0
  %462 = vmatpush1.msra.mxu0 %v417
  %463 = vmatprep.subr.mxu0 0.0
  %464 = vmatpush1.msra.mxu0 %v408
  %465 = vmatprep.subr.mxu0 0.0
  %466 = vmatpush1.msra.mxu0 %v404
  %467 = vmatprep.subr.mxu0 0.0
  %468 = vmatpush1.msra.mxu0 %v400
  %469 = vmatprep.subr.mxu0 0.0
  %470 = vmatpush1.msra.mxu0 %v308
  %471 = vmatprep.subr.mxu0 0.0
  %472 = vmatpush2.msra.mxu0 0.0
  %473 = vmatprep.subr.mxu0 0.0
  %474 = vmatpush2.msra.mxu0 0.0
  %475 = vmatprep.subr.mxu0 0.0
  %476 = vmatpush2.msra.mxu0 0.0
  %477 = vmatprep.subr.mxu0 0.0
  %478 = vmatpush2.msra.mxu0 0.0
  %479 = vmatprep.subr.mxu0 0.0
  %480 = vmatpush2.msra.mxu0 0.0
  %481 = vmatprep.subr.mxu0 0.0
  %482 = vmatpush2.msra.mxu0 0.0
  %483 = vmatprep.subr.mxu0 0.0
  %484 = vmatpush2.msra.mxu0 0.0
  %485 = vmatprep.subr.mxu0 0.0
  %486 = vmatpush2.msra.mxu0 0.0
  %487 = vmatprep.subr.mxu0 0.0
  %488 = vmatpush2.msra.mxu0 0.0
  %489 = vmatprep.subr.mxu0 0.0
  %490 = vmatpush2.msra.mxu0 0.0
  %491 = vmatprep.subr.mxu0 0.0
  %492 = vmatpush2.msra.mxu0 0.0
  %493 = vmatprep.subr.mxu0 0.0
  %494 = vmatpush2.msra.mxu0 0.0
  %495 = vmatprep.subr.mxu0 0.0
  %496 = vmatpush2.msra.mxu0 0.0
  %497 = vmatprep.subr.mxu0 0.0
  %498 = vmatpush2.msra.mxu0 0.0
  %499 = vmatprep.subr.mxu0 0.0
  %500 = vmatpush2.msra.mxu0 0.0
  %501 = vmatprep.subr.mxu0 0.0
  %502 = vmatpush2.msra.mxu0 0.0
  %503 = vmatprep.mubr.f32.mxu0 0.0
  %504 = vmatmul.mubr.f32.gmra.mxu0 %v437
  %v505 = vpop.f32.mrf.mxu0
  %v506 = vadd.f32 0.0, %v505
  %v507 = vpop.f32.mrf.mxu0
  %508 = vdwg.mxu0
  %509 = vrot.lane.b32.xlu0 %v308, 97
  %v510 = vpop.permute.xlu0 %509
  %511 = vrot.lane.b32.xlu0 %v337, 127
  %v512 = vpop.permute.xlu0 %511
  %513 = vrot.lane.b32.xlu0 %v338, 127
  %v514 = vpop.permute.xlu0 %513
  %vm515 = vcmask 1039360
  %v516 = vsel %vm515, %v512, %v514
  %517 = vrot.lane.b32.xlu0 %v390, 120
  %v518 = vpop.permute.xlu0 %517
  %519 = vrot.lane.b32.xlu0 %v391, 120
  %v520 = vpop.permute.xlu0 %519
  %vm521 = vcmask 982016
  %v522 = vsel %vm521, %v518, %v520
  %523 = vrot.lane.b32.xlu0 %v361, 89
  %v524 = vpop.permute.xlu0 %523
  %525 = vrot.lane.b32.xlu0 %v390, 119
  %v526 = vpop.permute.xlu0 %525
  %527 = vrot.lane.b32.xlu0 %v391, 119
  %v528 = vpop.permute.xlu0 %527
  %vm529 = vcmask 973824
  %v530 = vsel %vm529, %v526, %v528
  %531 = vrot.lane.b32.xlu0 %v337, 121
  %v532 = vpop.permute.xlu0 %531
  %533 = vrot.lane.b32.xlu0 %v338, 121
  %v534 = vpop.permute.xlu0 %533
  %vm535 = vcmask 990208
  %v536 = vsel %vm535, %v532, %v534
  %537 = vrot.lane.b32.xlu0 %v308, 90
  %v538 = vpop.permute.xlu0 %537
  %539 = vrot.lane.b32.xlu0 %v337, 120
  %v540 = vpop.permute.xlu0 %539
  %541 = vrot.lane.b32.xlu0 %v338, 120
  %v542 = vpop.permute.xlu0 %541
  %v543 = vsel %vm521, %v540, %v542
  %544 = vrot.lane.b32.xlu0 %v510, 30
  %v545 = vpop.permute.xlu0 %544
  %546 = vrot.lane.b32.xlu0 %v516, 30
  %v547 = vpop.permute.xlu0 %546
  %548 = vrot.lane.b32.xlu0 %v514, 30
  %v549 = vpop.permute.xlu0 %548
  %550 = vrot.lane.b32.xlu0 %v522, 30
  %v551 = vpop.permute.xlu0 %550
  %552 = vrot.lane.b32.xlu0 %v520, 30
  %v553 = vpop.permute.xlu0 %552
  %554 = vrot.lane.b32.xlu0 %v524, 30
  %v555 = vpop.permute.xlu0 %554
  %556 = vrot.lane.b32.xlu0 %v530, 30
  %v557 = vpop.permute.xlu0 %556
  %558 = vrot.lane.b32.xlu0 %v528, 30
  %v559 = vpop.permute.xlu0 %558
  %560 = vrot.lane.b32.xlu0 %v536, 30
  %v561 = vpop.permute.xlu0 %560
  %562 = vrot.lane.b32.xlu0 %v534, 30
  %v563 = vpop.permute.xlu0 %562
  %564 = vrot.lane.b32.xlu0 %v538, 30
  %v565 = vpop.permute.xlu0 %564
  %566 = vrot.lane.b32.xlu0 %v543, 30
  %v567 = vpop.permute.xlu0 %566
  %568 = vrot.lane.b32.xlu0 %v542, 30
  %v569 = vpop.permute.xlu0 %568
  %v570 = vsel %vm399, %v547, %v549
  %v571 = vsel %vm399, %v551, %v553
  %v572 = vsel %vm399, %v557, %v559
  %v573 = vsel %vm399, %v561, %v563
  %v574 = vsel %vm399, %v567, %v569
  %583 = vmatprep.subr.mxu0 0.0
  %584 = vmatpush1.msra.mxu0 0.0
  %585 = vmatprep.subr.mxu0 0.0
  %586 = vmatpush1.msra.mxu0 0.0
  %587 = vmatprep.subr.mxu0 0.0
  %588 = vmatpush1.msra.mxu0 0.0
  %589 = vmatprep.subr.mxu0 0.0
  %590 = vmatpush1.msra.mxu0 0.0
  %591 = vmatprep.subr.mxu0 0.0
  %592 = vmatpush1.msra.mxu0 0.0
  %593 = vmatprep.subr.mxu0 0.0
  %594 = vmatpush1.msra.mxu0 0.0
  %595 = vmatprep.subr.mxu0 0.0
  %596 = vmatpush1.msra.mxu0 0.0
  %597 = vmatprep.subr.mxu0 0.0
  %598 = vmatpush1.msra.mxu0 %v574
  %599 = vmatprep.subr.mxu0 0.0
  %600 = vmatpush1.msra.mxu0 %v565
  %601 = vmatprep.subr.mxu0 0.0
  %602 = vmatpush1.msra.mxu0 %v573
  %603 = vmatprep.subr.mxu0 0.0
  %604 = vmatpush1.msra.mxu0 %v572
  %605 = vmatprep.subr.mxu0 0.0
  %606 = vmatpush1.msra.mxu0 %v555
  %607 = vmatprep.subr.mxu0 0.0
  %608 = vmatpush1.msra.mxu0 %v571
  %609 = vmatprep.subr.mxu0 0.0
  %610 = vmatpush1.msra.mxu0 %v570
  %611 = vmatprep.subr.mxu0 0.0
  %612 = vmatpush1.msra.mxu0 %v545
  %613 = vmatprep.subr.mxu0 0.0
  %614 = vmatpush1.msra.mxu0 %v400
  %615 = vmatprep.subr.mxu0 0.0
  %616 = vmatpush2.msra.mxu0 0.0
  %617 = vmatprep.subr.mxu0 0.0
  %618 = vmatpush2.msra.mxu0 0.0
  %619 = vmatprep.subr.mxu0 0.0
  %620 = vmatpush2.msra.mxu0 0.0
  %621 = vmatprep.subr.mxu0 0.0
  %622 = vmatpush2.msra.mxu0 0.0
  %623 = vmatprep.subr.mxu0 0.0
  %624 = vmatpush2.msra.mxu0 0.0
  %625 = vmatprep.subr.mxu0 0.0
  %626 = vmatpush2.msra.mxu0 0.0
  %627 = vmatprep.subr.mxu0 0.0
  %628 = vmatpush2.msra.mxu0 0.0
  %629 = vmatprep.subr.mxu0 0.0
  %630 = vmatpush2.msra.mxu0 0.0
  %631 = vmatprep.subr.mxu0 0.0
  %632 = vmatpush2.msra.mxu0 0.0
  %633 = vmatprep.subr.mxu0 0.0
  %634 = vmatpush2.msra.mxu0 0.0
  %635 = vmatprep.subr.mxu0 0.0
  %636 = vmatpush2.msra.mxu0 0.0
  %637 = vmatprep.subr.mxu0 0.0
  %638 = vmatpush2.msra.mxu0 0.0
  %639 = vmatprep.subr.mxu0 0.0
  %640 = vmatpush2.msra.mxu0 0.0
  %641 = vmatprep.subr.mxu0 0.0
  %642 = vmatpush2.msra.mxu0 0.0
  %643 = vmatprep.subr.mxu0 0.0
  %644 = vmatpush2.msra.mxu0 0.0
  %645 = vmatprep.subr.mxu0 0.0
  %646 = vmatpush2.msra.mxu0 0.0
  %647 = vmatprep.mubr.f32.mxu0 0.0
  %648 = vmatmul.mubr.f32.gmra.mxu0 %v437
  %v649 = vpop.f32.mrf.mxu0
  %v650 = vadd.f32 0.0, %v649
  %v651 = vpop.f32.mrf.mxu0
  %652 = vdwg.mxu0
  %v653 = vmax.f32 %v506, %v650
  %654 = vrot.lane.b32.xlu0 %v390, 30
  %v655 = vpop.permute.xlu0 %654
  %656 = vrot.lane.b32.xlu0 %v391, 30
  %v657 = vpop.permute.xlu0 %656
  %v658 = vsel %vm399, %v655, %v657
  %659 = vrot.lane.b32.xlu0 %v361, 127
  %v660 = vpop.permute.xlu0 %659
  %661 = vrot.lane.b32.xlu0 %v308, 1
  %v662 = vpop.permute.xlu0 %661
  %663 = vrot.lane.b32.xlu0 %v337, 31
  %v664 = vpop.permute.xlu0 %663
  %665 = vrot.lane.b32.xlu0 %v338, 31
  %v666 = vpop.permute.xlu0 %665
  %vm667 = vcmask 252928
  %v668 = vsel %vm667, %v664, %v666
  %669 = vrot.lane.b32.xlu0 %v361, 121
  %v670 = vpop.permute.xlu0 %669
  %671 = vrot.lane.b32.xlu0 %v390, 23
  %v672 = vpop.permute.xlu0 %671
  %673 = vrot.lane.b32.xlu0 %v391, 23
  %v674 = vpop.permute.xlu0 %673
  %v675 = vsel %vm429, %v672, %v674
  %676 = vrot.lane.b32.xlu0 %v658, 120
  %v677 = vpop.permute.xlu0 %676
  %678 = vrot.lane.b32.xlu0 %v660, 120
  %v679 = vpop.permute.xlu0 %678
  %680 = vrot.lane.b32.xlu0 %v662, 120
  %v681 = vpop.permute.xlu0 %680
  %682 = vrot.lane.b32.xlu0 %v668, 120
  %v683 = vpop.permute.xlu0 %682
  %684 = vrot.lane.b32.xlu0 %v670, 120
  %v685 = vpop.permute.xlu0 %684
  %686 = vrot.lane.b32.xlu0 %v675, 120
  %v687 = vpop.permute.xlu0 %686
  %688 = vrot.lane.b32.xlu0 %v408, 120
  %v689 = vpop.permute.xlu0 %688
  %697 = vmatprep.subr.mxu0 0.0
  %698 = vmatpush1.msra.mxu0 0.0
  %699 = vmatprep.subr.mxu0 0.0
  %700 = vmatpush1.msra.mxu0 0.0
  %701 = vmatprep.subr.mxu0 0.0
  %702 = vmatpush1.msra.mxu0 0.0
  %703 = vmatprep.subr.mxu0 0.0
  %704 = vmatpush1.msra.mxu0 0.0
  %705 = vmatprep.subr.mxu0 0.0
  %706 = vmatpush1.msra.mxu0 0.0
  %707 = vmatprep.subr.mxu0 0.0
  %708 = vmatpush1.msra.mxu0 0.0
  %709 = vmatprep.subr.mxu0 0.0
  %710 = vmatpush1.msra.mxu0 0.0
  %711 = vmatprep.subr.mxu0 0.0
  %712 = vmatpush1.msra.mxu0 %v689
  %713 = vmatprep.subr.mxu0 0.0
  %714 = vmatpush1.msra.mxu0 %v687
  %715 = vmatprep.subr.mxu0 0.0
  %716 = vmatpush1.msra.mxu0 %v685
  %717 = vmatprep.subr.mxu0 0.0
  %718 = vmatpush1.msra.mxu0 %v433
  %719 = vmatprep.subr.mxu0 0.0
  %720 = vmatpush1.msra.mxu0 %v683
  %721 = vmatprep.subr.mxu0 0.0
  %722 = vmatpush1.msra.mxu0 %v681
  %723 = vmatprep.subr.mxu0 0.0
  %724 = vmatpush1.msra.mxu0 %v679
  %725 = vmatprep.subr.mxu0 0.0
  %726 = vmatpush1.msra.mxu0 %v677
  %727 = vmatprep.subr.mxu0 0.0
  %728 = vmatpush1.msra.mxu0 %v408
  %729 = vmatprep.subr.mxu0 0.0
  %730 = vmatpush2.msra.mxu0 0.0
  %731 = vmatprep.subr.mxu0 0.0
  %732 = vmatpush2.msra.mxu0 0.0
  %733 = vmatprep.subr.mxu0 0.0
  %734 = vmatpush2.msra.mxu0 0.0
  %735 = vmatprep.subr.mxu0 0.0
  %736 = vmatpush2.msra.mxu0 0.0
  %737 = vmatprep.subr.mxu0 0.0
  %738 = vmatpush2.msra.mxu0 0.0
  %739 = vmatprep.subr.mxu0 0.0
  %740 = vmatpush2.msra.mxu0 0.0
  %741 = vmatprep.subr.mxu0 0.0
  %742 = vmatpush2.msra.mxu0 0.0
  %743 = vmatprep.subr.mxu0 0.0
  %744 = vmatpush2.msra.mxu0 0.0
  %745 = vmatprep.subr.mxu0 0.0
  %746 = vmatpush2.msra.mxu0 0.0
  %747 = vmatprep.subr.mxu0 0.0
  %748 = vmatpush2.msra.mxu0 0.0
  %749 = vmatprep.subr.mxu0 0.0
  %750 = vmatpush2.msra.mxu0 0.0
  %751 = vmatprep.subr.mxu0 0.0
  %752 = vmatpush2.msra.mxu0 0.0
  %753 = vmatprep.subr.mxu0 0.0
  %754 = vmatpush2.msra.mxu0 0.0
  %755 = vmatprep.subr.mxu0 0.0
  %756 = vmatpush2.msra.mxu0 0.0
  %757 = vmatprep.subr.mxu0 0.0
  %758 = vmatpush2.msra.mxu0 0.0
  %759 = vmatprep.subr.mxu0 0.0
  %760 = vmatpush2.msra.mxu0 0.0
  %761 = vmatprep.mubr.f32.mxu0 0.0
  %762 = vmatmul.mubr.f32.gmra.mxu0 %v437
  %v763 = vpop.f32.mrf.mxu0
  %v764 = vadd.f32 0.0, %v763
  %v765 = vpop.f32.mrf.mxu0
  %766 = vdwg.mxu0
  %v767 = vmax.f32 %v653, %v764
  %768 = vrot.lane.b32.xlu0 %v361, 97
  %v769 = vpop.permute.xlu0 %768
  %770 = vrot.lane.b32.xlu0 %v390, 127
  %v771 = vpop.permute.xlu0 %770
  %772 = vrot.lane.b32.xlu0 %v391, 127
  %v773 = vpop.permute.xlu0 %772
  %v774 = vsel %vm515, %v771, %v773
  %775 = vrot.lane.b32.xlu0 %v337, 1
  %v776 = vpop.permute.xlu0 %775
  %777 = vrot.lane.b32.xlu0 %v338, 1
  %v778 = vpop.permute.xlu0 %777
  %vm779 = vcmask 7168
  %v780 = vsel %vm779, %v776, %v778
  %781 = vrot.lane.b32.xlu0 %v308, 98
  %v782 = vpop.permute.xlu0 %781
  %783 = vrot.lane.b32.xlu0 %v390, 121
  %v784 = vpop.permute.xlu0 %783
  %785 = vrot.lane.b32.xlu0 %v391, 121
  %v786 = vpop.permute.xlu0 %785
  %v787 = vsel %vm535, %v784, %v786
  %788 = vrot.lane.b32.xlu0 %v361, 90
  %v789 = vpop.permute.xlu0 %788
  %790 = vrot.lane.b32.xlu0 %v769, 22
  %v791 = vpop.permute.xlu0 %790
  %792 = vrot.lane.b32.xlu0 %v774, 22
  %v793 = vpop.permute.xlu0 %792
  %794 = vrot.lane.b32.xlu0 %v773, 22
  %v795 = vpop.permute.xlu0 %794
  %796 = vrot.lane.b32.xlu0 %v776, 22
  %v797 = vpop.permute.xlu0 %796
  %798 = vrot.lane.b32.xlu0 %v780, 22
  %v799 = vpop.permute.xlu0 %798
  %800 = vrot.lane.b32.xlu0 %v782, 22
  %v801 = vpop.permute.xlu0 %800
  %802 = vrot.lane.b32.xlu0 %v337, 22
  %v803 = vpop.permute.xlu0 %802
  %804 = vrot.lane.b32.xlu0 %v338, 22
  %v805 = vpop.permute.xlu0 %804
  %806 = vrot.lane.b32.xlu0 %v787, 22
  %v807 = vpop.permute.xlu0 %806
  %808 = vrot.lane.b32.xlu0 %v786, 22
  %v809 = vpop.permute.xlu0 %808
  %810 = vrot.lane.b32.xlu0 %v789, 22
  %v811 = vpop.permute.xlu0 %810
  %812 = vrot.lane.b32.xlu0 %v522, 22
  %v813 = vpop.permute.xlu0 %812
  %814 = vrot.lane.b32.xlu0 %v520, 22
  %v815 = vpop.permute.xlu0 %814
  %v816 = vsel %vm416, %v793, %v795
  %v817 = vsel %vm416, %v797, %v799
  %v818 = vsel %vm416, %v803, %v805
  %v819 = vsel %vm416, %v807, %v809
  %v820 = vsel %vm416, %v813, %v815
  %829 = vmatprep.subr.mxu0 0.0
  %830 = vmatpush1.msra.mxu0 0.0
  %831 = vmatprep.subr.mxu0 0.0
  %832 = vmatpush1.msra.mxu0 0.0
  %833 = vmatprep.subr.mxu0 0.0
  %834 = vmatpush1.msra.mxu0 0.0
  %835 = vmatprep.subr.mxu0 0.0
  %836 = vmatpush1.msra.mxu0 0.0
  %837 = vmatprep.subr.mxu0 0.0
  %838 = vmatpush1.msra.mxu0 0.0
  %839 = vmatprep.subr.mxu0 0.0
  %840 = vmatpush1.msra.mxu0 0.0
  %841 = vmatprep.subr.mxu0 0.0
  %842 = vmatpush1.msra.mxu0 0.0
  %843 = vmatprep.subr.mxu0 0.0
  %844 = vmatpush1.msra.mxu0 %v820
  %845 = vmatprep.subr.mxu0 0.0
  %846 = vmatpush1.msra.mxu0 %v811
  %847 = vmatprep.subr.mxu0 0.0
  %848 = vmatpush1.msra.mxu0 %v819
  %849 = vmatprep.subr.mxu0 0.0
  %850 = vmatpush1.msra.mxu0 %v818
  %851 = vmatprep.subr.mxu0 0.0
  %852 = vmatpush1.msra.mxu0 %v801
  %853 = vmatprep.subr.mxu0 0.0
  %854 = vmatpush1.msra.mxu0 %v817
  %855 = vmatprep.subr.mxu0 0.0
  %856 = vmatpush1.msra.mxu0 %v816
  %857 = vmatprep.subr.mxu0 0.0
  %858 = vmatpush1.msra.mxu0 %v791
  %859 = vmatprep.subr.mxu0 0.0
  %860 = vmatpush1.msra.mxu0 %v417
  %861 = vmatprep.subr.mxu0 0.0
  %862 = vmatpush2.msra.mxu0 0.0
  %863 = vmatprep.subr.mxu0 0.0
  %864 = vmatpush2.msra.mxu0 0.0
  %865 = vmatprep.subr.mxu0 0.0
  %866 = vmatpush2.msra.mxu0 0.0
  %867 = vmatprep.subr.mxu0 0.0
  %868 = vmatpush2.msra.mxu0 0.0
  %869 = vmatprep.subr.mxu0 0.0
  %870 = vmatpush2.msra.mxu0 0.0
  %871 = vmatprep.subr.mxu0 0.0
  %872 = vmatpush2.msra.mxu0 0.0
  %873 = vmatprep.subr.mxu0 0.0
  %874 = vmatpush2.msra.mxu0 0.0
  %875 = vmatprep.subr.mxu0 0.0
  %876 = vmatpush2.msra.mxu0 0.0
  %877 = vmatprep.subr.mxu0 0.0
  %878 = vmatpush2.msra.mxu0 0.0
  %879 = vmatprep.subr.mxu0 0.0
  %880 = vmatpush2.msra.mxu0 0.0
  %881 = vmatprep.subr.mxu0 0.0
  %882 = vmatpush2.msra.mxu0 0.0
  %883 = vmatprep.subr.mxu0 0.0
  %884 = vmatpush2.msra.mxu0 0.0
  %885 = vmatprep.subr.mxu0 0.0
  %886 = vmatpush2.msra.mxu0 0.0
  %887 = vmatprep.subr.mxu0 0.0
  %888 = vmatpush2.msra.mxu0 0.0
  %889 = vmatprep.subr.mxu0 0.0
  %890 = vmatpush2.msra.mxu0 0.0
  %891 = vmatprep.subr.mxu0 0.0
  %892 = vmatpush2.msra.mxu0 0.0
  %893 = vmatprep.mubr.f32.mxu0 0.0
  %894 = vmatmul.mubr.f32.gmra.mxu0 %v437
  %v895 = vpop.f32.mrf.mxu0
  %v896 = vadd.f32 0.0, %v895
  %v897 = vpop.f32.mrf.mxu0
  %898 = vdwg.mxu0
  %v899 = vmax.f32 %v767, %v896
  %v900 = vld [vmem:[%s4] sm:$0xff]
  %902 = vset.pattern.permute.xlu0 0
  %903 = vperm.xlu0 %902, %v900
  %v904 = vpop.permute.xlu0 %903
  %v906 = vadd.f32 %v899, %v904
  %v907 = vsub.f32 0.0, %v906
  %v908 = vmul.f32 %v907, 1.442695
  %v909 = vpow.pop %v908
  %v910 = vadd.f32 %v909, 1.0
  %v911 = vrcp.pop %v910
  %v912 = vld [vmem:[%s5] sm:$0xff]
  %v913 = vld [vmem:[%s5 + $0x8] sm:$0xff]
  %v914 = vld [vmem:[%s5 + $0x10] sm:$0xff]
  %v915 = vld [vmem:[%s5 + $0x18] sm:$0xff]
  %v916 = vld [vmem:[%s5 + $0x20] sm:$0xff]
  %v917 = vld [vmem:[%s5 + $0x28] sm:$0x1]
  %vm918 = vcmask 334848
  %v920 = vsel %vm918, %v911, 0
  %vm922 = vcmask 1040384
  %v924 = vsel %vm922, %v917, 0
  %926 = vmatprep.subr.mxu0 0.0
  %927 = vmatpush1.msra.mxu0 0.0
  %928 = vmatprep.subr.mxu0 0.0
  %929 = vmatpush1.msra.mxu0 0.0
  %930 = vmatprep.subr.mxu0 0.0
  %931 = vmatpush1.msra.mxu0 0.0
  %932 = vmatprep.subr.mxu0 0.0
  %933 = vmatpush1.msra.mxu0 0.0
  %934 = vmatprep.subr.mxu0 0.0
  %935 = vmatpush1.msra.mxu0 0.0
  %936 = vmatprep.subr.mxu0 0.0
  %937 = vmatpush1.msra.mxu0 0.0
  %938 = vmatprep.subr.mxu0 0.0
  %939 = vmatpush1.msra.mxu0 0.0
  %940 = vmatprep.subr.mxu0 0.0
  %941 = vmatpush1.msra.mxu0 0.0
  %942 = vmatprep.subr.mxu0 0.0
  %943 = vmatpush1.msra.mxu0 0.0
  %944 = vmatprep.subr.mxu0 0.0
  %945 = vmatpush1.msra.mxu0 0.0
  %946 = vmatprep.subr.mxu0 0.0
  %947 = vmatpush1.msra.mxu0 %v924
  %948 = vmatprep.subr.mxu0 0.0
  %949 = vmatpush1.msra.mxu0 %v916
  %950 = vmatprep.subr.mxu0 0.0
  %951 = vmatpush1.msra.mxu0 %v915
  %952 = vmatprep.subr.mxu0 0.0
  %953 = vmatpush1.msra.mxu0 %v914
  %954 = vmatprep.subr.mxu0 0.0
  %955 = vmatpush1.msra.mxu0 %v913
  %956 = vmatprep.subr.mxu0 0.0
  %957 = vmatpush1.msra.mxu0 %v912
  %958 = vmatprep.subr.mxu0 0.0
  %959 = vmatpush2.msra.mxu0 0.0
  %960 = vmatprep.subr.mxu0 0.0
  %961 = vmatpush2.msra.mxu0 0.0
  %962 = vmatprep.subr.mxu0 0.0
  %963 = vmatpush2.msra.mxu0 0.0
  %964 = vmatprep.subr.mxu0 0.0
  %965 = vmatpush2.msra.mxu0 0.0
  %966 = vmatprep.subr.mxu0 0.0
  %967 = vmatpush2.msra.mxu0 0.0
  %968 = vmatprep.subr.mxu0 0.0
  %969 = vmatpush2.msra.mxu0 0.0
  %970 = vmatprep.subr.mxu0 0.0
  %971 = vmatpush2.msra.mxu0 0.0
  %972 = vmatprep.subr.mxu0 0.0
  %973 = vmatpush2.msra.mxu0 0.0
  %974 = vmatprep.subr.mxu0 0.0
  %975 = vmatpush2.msra.mxu0 0.0
  %976 = vmatprep.subr.mxu0 0.0
  %977 = vmatpush2.msra.mxu0 0.0
  %978 = vmatprep.subr.mxu0 0.0
  %979 = vmatpush2.msra.mxu0 0.0
  %980 = vmatprep.subr.mxu0 0.0
  %981 = vmatpush2.msra.mxu0 0.0
  %982 = vmatprep.subr.mxu0 0.0
  %983 = vmatpush2.msra.mxu0 0.0
  %984 = vmatprep.subr.mxu0 0.0
  %985 = vmatpush2.msra.mxu0 0.0
  %986 = vmatprep.subr.mxu0 0.0
  %987 = vmatpush2.msra.mxu0 0.0
  %988 = vmatprep.subr.mxu0 0.0
  %989 = vmatpush2.msra.mxu0 0.0
  %990 = vmatprep.mubr.f32.mxu0 0.0
  %991 = vmatmul.mubr.f32.gmra.mxu0 %v920
  %v992 = vpop.f32.mrf.mxu0
  %v993 = vadd.f32 0.0, %v992
  %v994 = vpop.f32.mrf.mxu0
  %995 = vdwg.mxu0
  %v997 = vrot.slane %v993, 4
  %998 = vrot.lane.b32.xlu0 %v997, 124
  %v999 = vpop.permute.xlu0 %998
  %v1001 = vadd.f32 %v993, %v999
  %vm1002 = vcmask 31744
  %v1003 = vsel %vm1002, %v993, %v1001
  %vm1004 = vcmask 64512
  %v1005 = vsel %vm1004, %v1003, %v999
  %v1006 = vld [vmem:[%s6] sm:$0xf]
  %v1007 = vadd.f32 %v1005, %v1006
  %v1008 = vsub.f32 0.0, %v1007
  %v1009 = vmul.f32 %v1008, 1.442695
  %v1010 = vpow.pop %v1009
  %v1011 = vadd.f32 %v1010, 1.0
  %v1012 = vrcp.pop %v1011
  %vm1013 = vcmask 93184
  %1014 = vst.msk [vmem:[%s7] sm:$0xf] %vm1013, %v1012
  // Predicated region
  $region30: #{model_forward.1} parent=0 // pred_check
    _
  $region31: #{model_forward.1} parent=0 // pred_check_branch
    %1016 = sbr.rel (0) target = $region33
  $region32: #{model_forward.1} parent=0 // pred_region
    _
  $region33: #{model_forward.1} parent=0 // pred_fallthru
    _
  // Predicated region
  $region34: #{model_forward.1} parent=0 // pred_check
    _
  $region35: #{model_forward.1} parent=0 // pred_check_branch
    %1018 = sbr.rel (0) target = $region37
  $region36: #{model_forward.1} parent=0 // pred_region
    _
  $region37: #{model_forward.1} parent=0 // pred_fallthru
    _

</llo_original>
